<compile_context>
chip_gen: v7x
topology: tpu7x:2x2x1
jax: 0.10.0
libtpu: 0.0.40
codegen_flags: <defaults>
</compile_context>

<pallas_src>
import functools

import jax
import jax.numpy as jnp
from jax import lax
from jax.experimental import pallas as pl
from jax.experimental.pallas import tpu as pltpu


# ----------------------------------------------------------------------------
# host-side helpers (outside the kernel)
# ----------------------------------------------------------------------------
def _round_up(v, m):
    return ((v + m - 1) // m) * m


def _resize_bilinear_align_corners(x, out_h, out_w):
    """Matches F.interpolate(x, (out_h, out_w), mode='bilinear', align_corners=True)."""
    # TODO(synk): align_corners bilinear resize stays in plain JAX in the wrapper.
    n, c, in_h, in_w = x.shape
    if (in_h, in_w) == (out_h, out_w):
        return x

    def src(out_size, in_size):
        if out_size == 1:
            return jnp.zeros((1,), jnp.float32)
        return jnp.arange(out_size, dtype=jnp.float32) * ((in_size - 1) / (out_size - 1))

    ys, xs = src(out_h, in_h), src(out_w, in_w)
    y0 = jnp.floor(ys).astype(jnp.int32); y1 = jnp.minimum(y0 + 1, in_h - 1)
    x0 = jnp.floor(xs).astype(jnp.int32); x1 = jnp.minimum(x0 + 1, in_w - 1)
    wy = (ys - y0.astype(jnp.float32))[None, None, :, None]
    wx = (xs - x0.astype(jnp.float32))[None, None, None, :]
    top, bot = x[:, :, y0, :], x[:, :, y1, :]
    rows = top + (bot - top) * wy
    left, right = rows[:, :, :, x0], rows[:, :, :, x1]
    return (left + (right - left) * wx).astype(x.dtype)


def _pick_hw_tile(hw, target):
    """Pixel tile: a multiple of 128, <= max(target, 128).  Prefers a divisor of the
    128-padded hw (no padding waste) but never falls back to the full hw extent."""
    target = max(128, (int(target) // 128) * 128)
    hw128 = _round_up(hw, 128)
    if hw128 <= target:
        return hw128
    best = 128
    for m in range(target, 127, -128):
        if hw128 % m == 0:
            best = m
            break
    # If the only divisor within range is tiny, just use the target and pad.
    return best if best * 2 >= target else target


# ----------------------------------------------------------------------------
# in-kernel math helpers
# ----------------------------------------------------------------------------
def _erf_f32(x):
    # Abramowitz & Stegun 7.1.26 (|err| <= 1.5e-7): matches torch.erf to ~f32 noise
    # using only ops guaranteed to lower in Mosaic (abs / mul / add / exp / where).
    p = 0.3275911
    a1, a2, a3, a4, a5 = 0.254829592, -0.284496736, 1.421413741, -1.453152027, 1.061405429
    ax = jnp.abs(x)
    t = 1.0 / (1.0 + p * ax)
    poly = ((((a5 * t + a4) * t + a3) * t + a2) * t + a1) * t
    y = 1.0 - poly * jnp.exp(-ax * ax)
    return jnp.where(x < 0.0, -y, y)


def _gelu_erf(x):
    # Exact-form GELU (PyTorch nn.GELU() default), not the tanh approximation.
    return 0.5 * x * (1.0 + _erf_f32(x * 0.7071067811865476))


# ----------------------------------------------------------------------------
# Pallas kernel: one (channels x pixel-tile) block per grid step
# ----------------------------------------------------------------------------
def _splitter_kernel(*refs, split_factor, prev_nbins, min_depth, max_depth, eps, has_emb):
    if has_emb:
        (x_ref, emb_ref, bp_ref, w1_ref, b1_ref, w2_ref, b2_ref,
         b_ref, centers_ref) = refs
    else:
        (x_ref, bp_ref, w1_ref, b1_ref, w2_ref, b2_ref,
         b_ref, centers_ref) = refs
        emb_ref = None

    f32 = jnp.float32
    hi = lax.Precision.HIGHEST
    sf = split_factor

    x = x_ref[...].astype(f32)                                        # (C_in, T)
    if has_emb:
        x = x + emb_ref[...].astype(f32)                              # fused `x + prev_b_embedding`

    # ---- self._net: 1x1 conv -> GELU(erf) -> 1x1 conv -> ReLU (pixels on lanes)
    h = jnp.dot(w1_ref[...].astype(f32), x,
                preferred_element_type=f32, precision=hi) + b1_ref[...].astype(f32)
    h = _gelu_erf(h)
    s = jnp.dot(w2_ref[...].astype(f32), h,
                preferred_element_type=f32, precision=hi) + b2_ref[...].astype(f32)
    s = jnp.maximum(s, 0.0) + eps                                     # (C_out, T)

    # ---- normalized previous bin widths
    bp = bp_ref[...].astype(f32)                                      # (P, T)
    bpn = bp / jnp.sum(bp, axis=0, keepdims=True)                     # (P, T)

    # ---- split-factor normalization + b_prev scaling, per group (exact f32, no MXU):
    #        b[p*sf + k] = S[p*sf + k] * bpn[p] / sum_k' S[p*sf + k']
    rows = []
    for p in range(prev_nbins):
        grp = s[p * sf:(p + 1) * sf, :]                               # (sf, T)
        gs = jnp.sum(grp, axis=0, keepdims=True)                      # (1, T)
        rows.append(grp * (bpn[p:p + 1, :] / gs))
    b = jnp.concatenate(rows, axis=0)                                 # (C_out, T)

    # ---- bin centers:  centers = min_depth + R * (incl_cumsum(b) - 0.5*b)
    # Inclusive cumsum over the tiny channel axis: Hillis-Steele shift-add scan.
    c_out, t = b.shape
    cum = b
    step = 1
    while step < c_out:
        shifted = jnp.concatenate(
            [jnp.zeros((step, t), f32), cum[:c_out - step, :]], axis=0)
        cum = cum + shifted
        step *= 2
    centers = min_depth + (max_depth - min_depth) * (cum - 0.5 * b)

    b_ref[...] = b.astype(b_ref.dtype)
    centers_ref[...] = centers.astype(centers_ref.dtype)


# ----------------------------------------------------------------------------
# wrapper: LinearSplitter.forward
# ----------------------------------------------------------------------------
def linear_splitter_pallas(x, b_prev, w1, b1, w2, b2, *,
                           split_factor=2, min_depth=1e-3, max_depth=10.0,
                           prev_b_embedding=None, interpolate=True,
                           eps=1e-3, tile_hw_target=16384, out_dtype=None):
    """x: (N, C_in, H, W); b_prev: (N, prev_nbins, Hb, Wb);
    w1: (mlp, C_in), b1: (mlp,), w2: (C_out, mlp), b2: (C_out,),
    C_out = prev_nbins * split_factor.  Returns (b, B_centers), each (N, C_out, H, W).
    out_dtype defaults to x.dtype; pass jnp.bfloat16 to halve output HBM traffic."""
    n, c_in, h, w = x.shape
    mlp = int(w1.shape[0])
    c_out = int(w2.shape[0])
    split_factor = int(split_factor)
    prev_nbins = c_out // split_factor
    hw = h * w
    out_dtype = x.dtype if out_dtype is None else out_dtype

    has_emb = prev_b_embedding is not None
    emb3 = None
    if has_emb:
        if interpolate:
            prev_b_embedding = _resize_bilinear_align_corners(prev_b_embedding, h, w)
        emb3 = prev_b_embedding.reshape(n, c_in, hw)   # the add itself is fused in-kernel

    bp = _resize_bilinear_align_corners(b_prev, h, w)

    # NCHW -> (N, C, H*W): free reshape; channels on sublanes, pixels on lanes.
    x3 = x.reshape(n, c_in, hw)
    bp3 = bp.reshape(n, prev_nbins, hw)
    b1r = b1.reshape(mlp, 1)
    b2r = b2.reshape(c_out, 1)

    # Pixel tile (multiple of 128); pad hw to a multiple of it so stores stay
    # unmasked lane-dense and the pipeline stays double-buffered.
    tile = _pick_hw_tile(hw, tile_hw_target)
    hw_pad = _round_up(hw, tile)
    # Keep >= 2 grid steps so both v7x TensorCores get work (both axes "parallel").
    while n * (hw_pad // tile) < 2 and tile > 128:
        tile = max(128, (tile // 2) // 128 * 128)
        hw_pad = _round_up(hw, tile)

    if hw_pad != hw:
        pad = hw_pad - hw
        x3 = jnp.pad(x3, ((0, 0), (0, 0), (0, pad)))
        bp3 = jnp.pad(bp3, ((0, 0), (0, 0), (0, pad)), constant_values=1.0)
        if has_emb:
            emb3 = jnp.pad(emb3, ((0, 0), (0, 0), (0, pad)))

    grid = (n, hw_pad // tile)

    # Explicit VMEM budget: double-buffered I/O tiles + live intermediates with 2x
    # headroom; 16 MiB floor for tiny tiles, 48 MiB cap keeps v7x's 64 MiB/TC safe.
    per_pix_bytes = 4 * (2 * (c_in + prev_nbins + (c_in if has_emb else 0))
                         + 4 * c_out                # 2 outputs, double-buffered
                         + mlp + 4 * c_out + prev_nbins + 4)
    vmem_limit = int(min(max(2 * tile * per_pix_bytes, 16 * 1024 * 1024),
                         48 * 1024 * 1024))

    kernel = functools.partial(
        _splitter_kernel, split_factor=split_factor, prev_nbins=prev_nbins,
        min_depth=float(min_depth), max_depth=float(max_depth), eps=float(eps),
        has_emb=has_emb)

    def pix_spec(ch):
        return pl.BlockSpec((None, ch, tile), lambda nb, tb: (nb, 0, tb))

    in_specs = [pix_spec(c_in)]
    operands = [x3]
    if has_emb:
        in_specs.append(pix_spec(c_in))
        operands.append(emb3)
    in_specs += [
        pix_spec(prev_nbins),
        pl.BlockSpec((mlp, c_in), lambda nb, tb: (0, 0)),
        pl.BlockSpec((mlp, 1), lambda nb, tb: (0, 0)),
        pl.BlockSpec((c_out, mlp), lambda nb, tb: (0, 0)),
        pl.BlockSpec((c_out, 1), lambda nb, tb: (0, 0)),
    ]
    operands += [bp3, w1, b1r, w2, b2r]

    b3, centers3 = pl.pallas_call(
        kernel,
        out_shape=(jax.ShapeDtypeStruct((n, c_out, hw_pad), out_dtype),
                   jax.ShapeDtypeStruct((n, c_out, hw_pad), out_dtype)),
        grid_spec=pltpu.PrefetchScalarGridSpec(
            num_scalar_prefetch=0,
            grid=grid,
            in_specs=in_specs,
            out_specs=[pix_spec(c_out), pix_spec(c_out)],
        ),
        compiler_params=pltpu.CompilerParams(
            dimension_semantics=("parallel", "parallel"),
            vmem_limit_bytes=vmem_limit),
    )(*operands)

    if hw_pad != hw:
        b3 = b3[:, :, :hw]
        centers3 = centers3[:, :, :hw]
    return b3.reshape(n, c_out, h, w), centers3.reshape(n, c_out, h, w)


# ----------------------------------------------------------------------------
# plain-JAX reference of the PyTorch forward
# ----------------------------------------------------------------------------
def linear_splitter_ref(x, b_prev, w1, b1, w2, b2, *,
                        split_factor=2, min_depth=1e-3, max_depth=10.0,
                        prev_b_embedding=None, interpolate=True, eps=1e-3):
    if prev_b_embedding is not None:
        if interpolate:
            prev_b_embedding = _resize_bilinear_align_corners(
                prev_b_embedding, x.shape[-2], x.shape[-1])
        x = x + prev_b_embedding
    hi = lax.Precision.HIGHEST
    h = jnp.einsum("nchw,mc->nmhw", x, w1, precision=hi) + b1[None, :, None, None]
    h = jax.nn.gelu(h, approximate=False)          # exact erf form, like nn.GELU()
    s = jnp.einsum("nmhw,om->nohw", h, w2, precision=hi) + b2[None, :, None, None]
    s = jnp.maximum(s, 0.0) + eps
    n, c, hh, ww = s.shape
    prev_nbins = c // split_factor
    s5 = s.reshape(n, prev_nbins, split_factor, hh, ww)
    s_normed = s5 / jnp.sum(s5, axis=2, keepdims=True)
    bp = _resize_bilinear_align_corners(b_prev, hh, ww)
    bp = bp / jnp.sum(bp, axis=1, keepdims=True)
    b = (bp[:, :, None, :, :] * s_normed).reshape(n, c, hh, ww)
    widths = (max_depth - min_depth) * b
    widths = jnp.concatenate(
        [jnp.full((n, 1, hh, ww), min_depth, dtype=b.dtype), widths], axis=1)
    edges = jnp.cumsum(widths, axis=1)
    centers = 0.5 * (edges[:, :-1] + edges[:, 1:])
    return b, centers


if __name__ == "__main__":
    key = jax.random.PRNGKey(0)
    k_x, k_bp, k_emb, k_w1, k_b1, k_w2, k_b2 = jax.random.split(key, 7)

    # LinearSplitter(in_features=4, prev_nbins=4, split_factor=2, mlp_dim=32)
    N, C_IN, H, W = 2, 4, 16, 16
    MLP = 32
    PREV_NBINS, SPLIT = 4, 2
    C_OUT = PREV_NBINS * SPLIT
    MIN_D, MAX_D = 1e-3, 10.0

    x = jax.random.normal(k_x, (N, C_IN, H, W), dtype=jnp.float32)
    # b_prev / prev_b_embedding at a coarser resolution to exercise the
    # align_corners bilinear resize and the fused embedding add.
    b_prev = jax.random.uniform(k_bp, (N, PREV_NBINS, H // 2, W // 2),
                                dtype=jnp.float32, minval=0.1, maxval=1.0)
    emb = jax.random.normal(k_emb, (N, C_IN, H // 2, W // 2), dtype=jnp.float32) * 0.5

    # Conv2d 1x1 weights with the 1x1 kernel dims squeezed: (out_ch, in_ch)
    w1 = jax.random.normal(k_w1, (MLP, C_IN), dtype=jnp.float32) * 0.1
    b1 = jax.random.normal(k_b1, (MLP,), dtype=jnp.float32) * 0.1
    w2 = jax.random.normal(k_w2, (C_OUT, MLP), dtype=jnp.float32) * 0.1
    b2 = jax.random.normal(k_b2, (C_OUT,), dtype=jnp.float32) * 0.1

    for emb_arg in (emb, None):   # with and without the fused prev_b_embedding path
        b_out, centers_out = linear_splitter_pallas(
            x, b_prev, w1, b1, w2, b2,
            split_factor=SPLIT, min_depth=MIN_D, max_depth=MAX_D,
            prev_b_embedding=emb_arg)
        b_out = jax.block_until_ready(b_out)
        centers_out = jax.block_until_ready(centers_out)

        b_ref, centers_ref = linear_splitter_ref(
            x, b_prev, w1, b1, w2, b2,
            split_factor=SPLIT, min_depth=MIN_D, max_depth=MAX_D,
            prev_b_embedding=emb_arg)

        assert b_out.shape == (N, C_OUT, H, W), b_out.shape
        assert centers_out.shape == (N, C_OUT, H, W), centers_out.shape
        assert jnp.allclose(b_out, b_ref, atol=5e-5, rtol=5e-5), "b mismatch vs reference"
        assert jnp.allclose(centers_out, centers_ref, atol=5e-4, rtol=5e-5), \
            "B_centers mismatch vs reference"

    print("KERNEL_OK")
</pallas_src>

<mosaic_0001>
module attributes {stable_mosaic.version = 11 : i64} {
  func.func @_splitter_kernel(%arg0: i32, %arg1: i32, %arg2: memref<1x4x256xf32, #tpu.memory_space<vmem>>, %arg3: memref<1x4x256xf32, #tpu.memory_space<vmem>>, %arg4: memref<1x4x256xf32, #tpu.memory_space<vmem>>, %arg5: memref<32x4xf32, #tpu.memory_space<vmem>>, %arg6: memref<32x1xf32, #tpu.memory_space<vmem>>, %arg7: memref<8x32xf32, #tpu.memory_space<vmem>>, %arg8: memref<8x1xf32, #tpu.memory_space<vmem>>, %arg9: memref<1x8x256xf32, #tpu.memory_space<vmem>>, %arg10: memref<1x8x256xf32, #tpu.memory_space<vmem>>) attributes {dimension_semantics = [#tpu.dimension_semantics<parallel>, #tpu.dimension_semantics<parallel>], iteration_bounds = array<i64: 2, 1>, scalar_prefetch = 0 : i64, scratch_operands = 0 : i64, tpu.core_type = #tpu.core_type<tc>, window_params = [{transform_indices = @transform_0, window_bounds = array<i64: 1, 4, 256>}, {transform_indices = @transform_1, window_bounds = array<i64: 1, 4, 256>}, {transform_indices = @transform_2, window_bounds = array<i64: 1, 4, 256>}, {pipeline_mode = #tpu.pipeline_mode<synchronous>, transform_indices = @transform_3, window_bounds = array<i64: 32, 4>}, {pipeline_mode = #tpu.pipeline_mode<synchronous>, transform_indices = @transform_4, window_bounds = array<i64: 32, 1>}, {pipeline_mode = #tpu.pipeline_mode<synchronous>, transform_indices = @transform_5, window_bounds = array<i64: 8, 32>}, {pipeline_mode = #tpu.pipeline_mode<synchronous>, transform_indices = @transform_6, window_bounds = array<i64: 8, 1>}, {transform_indices = @transform_7, window_bounds = array<i64: 1, 8, 256>}, {transform_indices = @transform_8, window_bounds = array<i64: 1, 8, 256>}]} {
    %c0 = arith.constant 0 : index
    %c0_0 = arith.constant 0 : index
    %c0_1 = arith.constant 0 : index
    %0 = vector.load %arg2[%c0, %c0_0, %c0_1] : memref<1x4x256xf32, #tpu.memory_space<vmem>>, vector<1x4x256xf32>
    %1 = vector.shape_cast %0 : vector<1x4x256xf32> to vector<4x256xf32>
    %c0_2 = arith.constant 0 : index
    %c0_3 = arith.constant 0 : index
    %c0_4 = arith.constant 0 : index
    %2 = vector.load %arg3[%c0_2, %c0_3, %c0_4] : memref<1x4x256xf32, #tpu.memory_space<vmem>>, vector<1x4x256xf32>
    %3 = vector.shape_cast %2 : vector<1x4x256xf32> to vector<4x256xf32>
    %4 = arith.addf %1, %3 : vector<4x256xf32>
    %c0_5 = arith.constant 0 : index
    %c0_6 = arith.constant 0 : index
    %5 = vector.load %arg5[%c0_5, %c0_6] : memref<32x4xf32, #tpu.memory_space<vmem>>, vector<32x4xf32>
    %cst = arith.constant dense<0.000000e+00> : vector<32x256xf32>
    %6 = tpu.matmul %5, %4, %cst {dimension_numbers = #tpu.dot_dimension_numbers<[1], [0], [0], [1], [0, 0, 1, 1], [], []>, precision = #tpu.contract_precision<fp32>} : vector<32x4xf32>, vector<4x256xf32>, vector<32x256xf32> -> vector<32x256xf32>
    %c0_7 = arith.constant 0 : index
    %c0_8 = arith.constant 0 : index
    %7 = vector.load %arg6[%c0_7, %c0_8] : memref<32x1xf32, #tpu.memory_space<vmem>>, vector<32x1xf32>
    %8 = vector.broadcast %7 : vector<32x1xf32> to vector<32x256xf32>
    %9 = arith.addf %6, %8 : vector<32x256xf32>
    %cst_9 = arith.constant 5.000000e-01 : f32
    %10 = vector.broadcast %cst_9 : f32 to vector<32x256xf32>
    %11 = arith.mulf %10, %9 : vector<32x256xf32>
    %cst_10 = arith.constant 0.707106769 : f32
    %12 = vector.broadcast %cst_10 : f32 to vector<32x256xf32>
    %13 = arith.mulf %9, %12 : vector<32x256xf32>
    %14 = math.absf %13 : vector<32x256xf32>
    %cst_11 = arith.constant 0.327591091 : f32
    %15 = vector.broadcast %cst_11 : f32 to vector<32x256xf32>
    %16 = arith.mulf %15, %14 : vector<32x256xf32>
    %cst_12 = arith.constant 1.000000e+00 : f32
    %17 = vector.broadcast %cst_12 : f32 to vector<32x256xf32>
    %18 = arith.addf %17, %16 : vector<32x256xf32>
    %cst_13 = arith.constant 1.000000e+00 : f32
    %19 = vector.broadcast %cst_13 : f32 to vector<32x256xf32>
    %20 = arith.divf %19, %18 : vector<32x256xf32>
    %cst_14 = arith.constant 1.06140542 : f32
    %21 = vector.broadcast %cst_14 : f32 to vector<32x256xf32>
    %22 = arith.mulf %21, %20 : vector<32x256xf32>
    %cst_15 = arith.constant -1.45315206 : f32
    %23 = vector.broadcast %cst_15 : f32 to vector<32x256xf32>
    %24 = arith.addf %22, %23 : vector<32x256xf32>
    %25 = arith.mulf %24, %20 : vector<32x256xf32>
    %cst_16 = arith.constant 1.42141378 : f32
    %26 = vector.broadcast %cst_16 : f32 to vector<32x256xf32>
    %27 = arith.addf %25, %26 : vector<32x256xf32>
    %28 = arith.mulf %27, %20 : vector<32x256xf32>
    %cst_17 = arith.constant -0.284496725 : f32
    %29 = vector.broadcast %cst_17 : f32 to vector<32x256xf32>
    %30 = arith.addf %28, %29 : vector<32x256xf32>
    %31 = arith.mulf %30, %20 : vector<32x256xf32>
    %cst_18 = arith.constant 0.254829586 : f32
    %32 = vector.broadcast %cst_18 : f32 to vector<32x256xf32>
    %33 = arith.addf %31, %32 : vector<32x256xf32>
    %34 = arith.mulf %33, %20 : vector<32x256xf32>
    %cst_19 = arith.constant 0.000000e+00 : f32
    %35 = vector.broadcast %cst_19 : f32 to vector<32x256xf32>
    %36 = arith.subf %35, %14 : vector<32x256xf32>
    %37 = arith.mulf %36, %14 : vector<32x256xf32>
    %38 = math.exp %37 : vector<32x256xf32>
    %39 = arith.mulf %34, %38 : vector<32x256xf32>
    %cst_20 = arith.constant 1.000000e+00 : f32
    %40 = vector.broadcast %cst_20 : f32 to vector<32x256xf32>
    %41 = arith.subf %40, %39 : vector<32x256xf32>
    %cst_21 = arith.constant 0.000000e+00 : f32
    %42 = vector.broadcast %cst_21 : f32 to vector<32x256xf32>
    %43 = arith.cmpf olt, %13, %42 : vector<32x256xf32>
    %cst_22 = arith.constant 0.000000e+00 : f32
    %44 = vector.broadcast %cst_22 : f32 to vector<32x256xf32>
    %45 = arith.subf %44, %41 : vector<32x256xf32>
    %46 = arith.select %43, %45, %41 : vector<32x256xi1>, vector<32x256xf32>
    %cst_23 = arith.constant 1.000000e+00 : f32
    %47 = vector.broadcast %cst_23 : f32 to vector<32x256xf32>
    %48 = arith.addf %47, %46 : vector<32x256xf32>
    %49 = arith.mulf %11, %48 : vector<32x256xf32>
    %c0_24 = arith.constant 0 : index
    %c0_25 = arith.constant 0 : index
    %50 = vector.load %arg7[%c0_24, %c0_25] : memref<8x32xf32, #tpu.memory_space<vmem>>, vector<8x32xf32>
    %cst_26 = arith.constant dense<0.000000e+00> : vector<8x256xf32>
    %51 = tpu.matmul %50, %49, %cst_26 {dimension_numbers = #tpu.dot_dimension_numbers<[1], [0], [0], [1], [0, 0, 1, 1], [], []>, precision = #tpu.contract_precision<fp32>} : vector<8x32xf32>, vector<32x256xf32>, vector<8x256xf32> -> vector<8x256xf32>
    %c0_27 = arith.constant 0 : index
    %c0_28 = arith.constant 0 : index
    %52 = vector.load %arg8[%c0_27, %c0_28] : memref<8x1xf32, #tpu.memory_space<vmem>>, vector<8x1xf32>
    %53 = vector.broadcast %52 : vector<8x1xf32> to vector<8x256xf32>
    %54 = arith.addf %51, %53 : vector<8x256xf32>
    %cst_29 = arith.constant 0.000000e+00 : f32
    %55 = vector.broadcast %cst_29 : f32 to vector<8x256xf32>
    %56 = arith.maximumf %54, %55 : vector<8x256xf32>
    %cst_30 = arith.constant 1.000000e-03 : f32
    %57 = vector.broadcast %cst_30 : f32 to vector<8x256xf32>
    %58 = arith.addf %56, %57 : vector<8x256xf32>
    %c0_31 = arith.constant 0 : index
    %c0_32 = arith.constant 0 : index
    %c0_33 = arith.constant 0 : index
    %59 = vector.load %arg4[%c0_31, %c0_32, %c0_33] : memref<1x4x256xf32, #tpu.memory_space<vmem>>, vector<1x4x256xf32>
    %60 = vector.shape_cast %59 : vector<1x4x256xf32> to vector<4x256xf32>
    %cst_34 = arith.constant dense<0.000000e+00> : vector<256xf32>
    %61 = vector.multi_reduction <add>, %60, %cst_34 [0] : vector<4x256xf32> to vector<256xf32>
    %62 = vector.shape_cast %61 : vector<256xf32> to vector<1x256xf32>
    %63 = vector.broadcast %62 : vector<1x256xf32> to vector<4x256xf32>
    %64 = arith.divf %60, %63 : vector<4x256xf32>
    %65 = vector.extract_strided_slice %58 {offsets = [0, 0], sizes = [2, 256], strides = [1, 1]} : vector<8x256xf32> to vector<2x256xf32>
    %cst_35 = arith.constant dense<0.000000e+00> : vector<256xf32>
    %66 = vector.multi_reduction <add>, %65, %cst_35 [0] : vector<2x256xf32> to vector<256xf32>
    %67 = vector.shape_cast %66 : vector<256xf32> to vector<1x256xf32>
    %68 = vector.extract_strided_slice %64 {offsets = [0, 0], sizes = [1, 256], strides = [1, 1]} : vector<4x256xf32> to vector<1x256xf32>
    %69 = arith.divf %68, %67 : vector<1x256xf32>
    %70 = vector.broadcast %69 : vector<1x256xf32> to vector<2x256xf32>
    %71 = arith.mulf %65, %70 : vector<2x256xf32>
    %72 = vector.extract_strided_slice %58 {offsets = [2, 0], sizes = [2, 256], strides = [1, 1]} : vector<8x256xf32> to vector<2x256xf32>
    %cst_36 = arith.constant dense<0.000000e+00> : vector<256xf32>
    %73 = vector.multi_reduction <add>, %72, %cst_36 [0] : vector<2x256xf32> to vector<256xf32>
    %74 = vector.shape_cast %73 : vector<256xf32> to vector<1x256xf32>
    %75 = vector.extract_strided_slice %64 {offsets = [1, 0], sizes = [1, 256], strides = [1, 1]} : vector<4x256xf32> to vector<1x256xf32>
    %76 = arith.divf %75, %74 : vector<1x256xf32>
    %77 = vector.broadcast %76 : vector<1x256xf32> to vector<2x256xf32>
    %78 = arith.mulf %72, %77 : vector<2x256xf32>
    %79 = vector.extract_strided_slice %58 {offsets = [4, 0], sizes = [2, 256], strides = [1, 1]} : vector<8x256xf32> to vector<2x256xf32>
    %cst_37 = arith.constant dense<0.000000e+00> : vector<256xf32>
    %80 = vector.multi_reduction <add>, %79, %cst_37 [0] : vector<2x256xf32> to vector<256xf32>
    %81 = vector.shape_cast %80 : vector<256xf32> to vector<1x256xf32>
    %82 = vector.extract_strided_slice %64 {offsets = [2, 0], sizes = [1, 256], strides = [1, 1]} : vector<4x256xf32> to vector<1x256xf32>
    %83 = arith.divf %82, %81 : vector<1x256xf32>
    %84 = vector.broadcast %83 : vector<1x256xf32> to vector<2x256xf32>
    %85 = arith.mulf %79, %84 : vector<2x256xf32>
    %86 = vector.extract_strided_slice %58 {offsets = [6, 0], sizes = [2, 256], strides = [1, 1]} : vector<8x256xf32> to vector<2x256xf32>
    %cst_38 = arith.constant dense<0.000000e+00> : vector<256xf32>
    %87 = vector.multi_reduction <add>, %86, %cst_38 [0] : vector<2x256xf32> to vector<256xf32>
    %88 = vector.shape_cast %87 : vector<256xf32> to vector<1x256xf32>
    %89 = vector.extract_strided_slice %64 {offsets = [3, 0], sizes = [1, 256], strides = [1, 1]} : vector<4x256xf32> to vector<1x256xf32>
    %90 = arith.divf %89, %88 : vector<1x256xf32>
    %91 = vector.broadcast %90 : vector<1x256xf32> to vector<2x256xf32>
    %92 = arith.mulf %86, %91 : vector<2x256xf32>
    %93 = tpu.concatenate %71, %78, %85, %92 in 0 : vector<2x256xf32>, vector<2x256xf32>, vector<2x256xf32>, vector<2x256xf32> -> vector<8x256xf32>
    %cst_39 = arith.constant 0.000000e+00 : f32
    %94 = vector.broadcast %cst_39 : f32 to vector<1x256xf32>
    %95 = vector.extract_strided_slice %93 {offsets = [0, 0], sizes = [7, 256], strides = [1, 1]} : vector<8x256xf32> to vector<7x256xf32>
    %96 = tpu.concatenate %94, %95 in 0 : vector<1x256xf32>, vector<7x256xf32> -> vector<8x256xf32>
    %97 = arith.addf %93, %96 : vector<8x256xf32>
    %cst_40 = arith.constant 0.000000e+00 : f32
    %98 = vector.broadcast %cst_40 : f32 to vector<2x256xf32>
    %99 = vector.extract_strided_slice %97 {offsets = [0, 0], sizes = [6, 256], strides = [1, 1]} : vector<8x256xf32> to vector<6x256xf32>
    %100 = tpu.concatenate %98, %99 in 0 : vector<2x256xf32>, vector<6x256xf32> -> vector<8x256xf32>
    %101 = arith.addf %97, %100 : vector<8x256xf32>
    %cst_41 = arith.constant 0.000000e+00 : f32
    %102 = vector.broadcast %cst_41 : f32 to vector<4x256xf32>
    %103 = vector.extract_strided_slice %101 {offsets = [0, 0], sizes = [4, 256], strides = [1, 1]} : vector<8x256xf32> to vector<4x256xf32>
    %104 = tpu.concatenate %102, %103 in 0 : vector<4x256xf32>, vector<4x256xf32> -> vector<8x256xf32>
    %105 = arith.addf %101, %104 : vector<8x256xf32>
    %cst_42 = arith.constant 5.000000e-01 : f32
    %106 = vector.broadcast %cst_42 : f32 to vector<8x256xf32>
    %107 = arith.mulf %106, %93 : vector<8x256xf32>
    %108 = arith.subf %105, %107 : vector<8x256xf32>
    %cst_43 = arith.constant 9.99899959 : f32
    %109 = vector.broadcast %cst_43 : f32 to vector<8x256xf32>
    %110 = arith.mulf %109, %108 : vector<8x256xf32>
    %cst_44 = arith.constant 1.000000e-03 : f32
    %111 = vector.broadcast %cst_44 : f32 to vector<8x256xf32>
    %112 = arith.addf %111, %110 : vector<8x256xf32>
    %c0_45 = arith.constant 0 : index
    %c0_46 = arith.constant 0 : index
    %c0_47 = arith.constant 0 : index
    %113 = vector.load %arg9[%c0_45, %c0_46, %c0_47] : memref<1x8x256xf32, #tpu.memory_space<vmem>>, vector<1x8x256xf32>
    %114 = vector.shape_cast %113 : vector<1x8x256xf32> to vector<8x256xf32>
    %115 = vector.shape_cast %93 : vector<8x256xf32> to vector<1x8x256xf32>
    tpu.vector_store %arg9[%c0_45, %c0_46, %c0_47], %115 {strides = array<i32>} : memref<1x8x256xf32, #tpu.memory_space<vmem>>, vector<1x8x256xf32>,
    %c0_48 = arith.constant 0 : index
    %c0_49 = arith.constant 0 : index
    %c0_50 = arith.constant 0 : index
    %116 = vector.load %arg10[%c0_48, %c0_49, %c0_50] : memref<1x8x256xf32, #tpu.memory_space<vmem>>, vector<1x8x256xf32>
    %117 = vector.shape_cast %116 : vector<1x8x256xf32> to vector<8x256xf32>
    %118 = vector.shape_cast %112 : vector<8x256xf32> to vector<1x8x256xf32>
    tpu.vector_store %arg10[%c0_48, %c0_49, %c0_50], %118 {strides = array<i32>} : memref<1x8x256xf32, #tpu.memory_space<vmem>>, vector<1x8x256xf32>,
    return
  }
  func.func @transform_0(%arg0: i32, %arg1: i32) -> (i32, i32, i32) {
    %c0_i32 = arith.constant 0 : i32
    %c0_i32_0 = arith.constant 0 : i32
    return %arg0, %c0_i32, %arg1 : i32, i32, i32
  }
  func.func @transform_1(%arg0: i32, %arg1: i32) -> (i32, i32, i32) {
    %c0_i32 = arith.constant 0 : i32
    %c0_i32_0 = arith.constant 0 : i32
    return %arg0, %c0_i32, %arg1 : i32, i32, i32
  }
  func.func @transform_2(%arg0: i32, %arg1: i32) -> (i32, i32, i32) {
    %c0_i32 = arith.constant 0 : i32
    %c0_i32_0 = arith.constant 0 : i32
    return %arg0, %c0_i32, %arg1 : i32, i32, i32
  }
  func.func @transform_3(%arg0: i32, %arg1: i32) -> (i32, i32) {
    %c0_i32 = arith.constant 0 : i32
    %c0_i32_0 = arith.constant 0 : i32
    %c0_i32_1 = arith.constant 0 : i32
    return %c0_i32, %c0_i32_0 : i32, i32
  }
  func.func @transform_4(%arg0: i32, %arg1: i32) -> (i32, i32) {
    %c0_i32 = arith.constant 0 : i32
    %c0_i32_0 = arith.constant 0 : i32
    %c0_i32_1 = arith.constant 0 : i32
    return %c0_i32, %c0_i32_0 : i32, i32
  }
  func.func @transform_5(%arg0: i32, %arg1: i32) -> (i32, i32) {
    %c0_i32 = arith.constant 0 : i32
    %c0_i32_0 = arith.constant 0 : i32
    %c0_i32_1 = arith.constant 0 : i32
    return %c0_i32, %c0_i32_0 : i32, i32
  }
  func.func @transform_6(%arg0: i32, %arg1: i32) -> (i32, i32) {
    %c0_i32 = arith.constant 0 : i32
    %c0_i32_0 = arith.constant 0 : i32
    %c0_i32_1 = arith.constant 0 : i32
    return %c0_i32, %c0_i32_0 : i32, i32
  }
  func.func @transform_7(%arg0: i32, %arg1: i32) -> (i32, i32, i32) {
    %c0_i32 = arith.constant 0 : i32
    %c0_i32_0 = arith.constant 0 : i32
    return %arg0, %c0_i32, %arg1 : i32, i32, i32
  }
  func.func @transform_8(%arg0: i32, %arg1: i32) -> (i32, i32, i32) {
    %c0_i32 = arith.constant 0 : i32
    %c0_i32_0 = arith.constant 0 : i32
    return %arg0, %c0_i32, %arg1 : i32, i32, i32
  }
}

</mosaic_0001>

<llo_original>
// kernel: tpu_custom_call.1
$region0: #{tpu_custom_call.1}
  #allocation0 [shape = 'u32[]', space=smem, size = 0x4, offset = 0x4, fixed_abs, tag = 'smem constant byte address 0x4 - core index']
  #allocation1 [shape = 'u32[144,128]{1,0:T(1,128)}', space=vmem, size = 0x12000, scoped, tag = 'internal scratch']
  %s0 = inlined_call_operand.vmem [shape: f32[2,4,256], index: 0, kind: input, shape index: {}]
  %s1 = inlined_call_operand.vmem [shape: f32[2,4,256], index: 1, kind: input, shape index: {}]
  %s2 = inlined_call_operand.vmem [shape: f32[2,4,256], index: 2, kind: input, shape index: {}]
  %s3 = inlined_call_operand.vmem [shape: f32[32,4], index: 3, kind: input, shape index: {}]
  %s4 = inlined_call_operand.vmem [shape: f32[32,1], index: 4, kind: input, shape index: {}]
  %s5 = inlined_call_operand.vmem [shape: f32[8,32], index: 5, kind: input, shape index: {}]
  %s6 = inlined_call_operand.vmem [shape: f32[8,1], index: 6, kind: input, shape index: {}]
  %s7 = inlined_call_operand.hbm [shape: f32[2,8,256], index: 7, kind: output, shape index: {0}]
  %s8 = inlined_call_operand.hbm [shape: f32[2,8,256], index: 8, kind: output, shape index: {1}]
  %9 = xla_tuple %s7, %s8
  %s10 = sld [smem:[#allocation0]]
  $region69: #{tpu_custom_call.1} parent=0
    _
  %s12 = ssub.s32 1, %s10
  %s13 = scalar_select 0, %s12, %s10
  $region1: #{tpu_custom_call.1} parent=0
    #allocation2 [shape = 'u8[16384]{0}', space=vmem, size = 0x4000, scoped, tag = 'output window, operand 0']
    #allocation3 [shape = 's32[2]{0}', space=sflag, size = 0x8, scoped, tag = 'scoped memory for tpu_custom_call.1']
    #allocation4 [shape = 'u8[16384]{0}', space=vmem, size = 0x4000, scoped, tag = 'output window, operand 1']
    #allocation5 [shape = 's32[2]{0}', space=sflag, size = 0x8, scoped, tag = 'scoped memory for tpu_custom_call.1']
    %14 = vsyncpa [#allocation3], 0
    %s15 = scalar_lea.sflag [#allocation3], 1
    %16 = vsyncpa %s15, 0
    %17 = vsyncpa [#allocation5], 0
    %s18 = scalar_lea.sflag [#allocation5], 1
    %19 = vsyncpa %s18, 0
    loop: start=0, step=1, limit=4
    $region2: #{tpu_custom_call.1} parent=1 // loop_pre_header
      _
    $region3: #{tpu_custom_call.1} parent=1 // loop_header
      %s21 = sphi 0, %s25
      %p22 = scmp.ge.s32.totalorder %s21, 4
      %s28 = sphi 0, %s40
      %s29 = sphi 0, %s36
      %s30 = sphi 0, %s28
      %s31 = sphi 0, %s29
      %s32 = sphi 0, %s30
      %s33 = sphi 0, %s31
      %s45 = sphi 0, %s47
      %s48 = sphi 0, %s45
      %s49 = sphi 0, %s48
      %s65 = sphi 0, %s49
      %s73 = sphi 0, %s75
      %s76 = sphi 0, %s73
      %s77 = sphi 0, %s76
      %s93 = sphi 0, %s77
      %s101 = sphi 0, %s103
      %s104 = sphi 0, %s101
      %s105 = sphi 0, %s104
      %s121 = sphi 0, %s105
      %s125 = sphi 0, %s125
      %s127 = sphi 0, %s125
      %s128 = sphi 0, %s127
      %s142 = sphi 0, %s128
      %s146 = sphi 0, %s146
      %s148 = sphi 0, %s146
      %s149 = sphi 0, %s148
      %s163 = sphi 0, %s149
      %s167 = sphi 0, %s167
      %s169 = sphi 0, %s167
      %s170 = sphi 0, %s169
      %s184 = sphi 0, %s170
      %s188 = sphi 0, %s188
      %s190 = sphi 0, %s188
      %s191 = sphi 0, %s190
      %s205 = sphi 0, %s191
      %s213 = sphi 0, %s215
      %s216 = sphi 0, %s213
      %s217 = sphi 0, %s216
      %s233 = sphi 0, %s217
      %s241 = sphi 0, %s243
      %s244 = sphi 0, %s241
      %s245 = sphi 0, %s244
      %s261 = sphi 0, %s245
    $region4: #{tpu_custom_call.1} parent=1 // loop_header_branch
      %24 = sbr.rel (%p22) target = $region8
    $region5: #{tpu_custom_call.1} parent=1 // loop_body
      %s26 = ssub.s32 %s21, 1
      %s27 = ssub.s32 %s21, 2
      %s34 = sadd.s32 1, %s29
      %p35 = scmp.ge.s32.totalorder %s34, 1
      %s36 = scalar_select %p35, 0, %s34
      %s37 = sadd.s32 1, %s28
      %s38 = scalar_select %p35, %s37, %s28
      %p39 = scmp.ge.s32.totalorder %s38, 2
      %s40 = scalar_select %p39, 0, %s38
      %s41 = ssub.s32 %s28, %s40
      %s42 = ssub.s32 %s29, %s36
      %s43 = sor.u32 %s41, %s42
      %p44 = scmp.eq.s32.totalorder %s43, 0
      %s46 = sadd.s32 %s45, 1
      %s47 = scalar_select %p44, %s45, %s46
      %p50 = pneg %p44
      %p51 = scmp.eq.s32.totalorder %s21, 1
      %p52 = por %p50, %p51
      %p53 = scmp.ne.s32.totalorder %s45, %s48
      %p54 = scmp.eq.s32.totalorder %s21, 0
      %p55 = por %p53, %p54
      %p56 = scmp.ne.s32.totalorder %s45, %s48
      %p57 = scmp.eq.s32.totalorder %s26, 1
      %p58 = por %p56, %p57
      %p59 = scmp.ne.s32.totalorder %s48, %s49
      %p60 = scmp.eq.s32.totalorder %s26, 0
      %p61 = por %p59, %p60
      %p62 = scmp.ne.s32.totalorder %s48, %s49
      %p63 = scmp.eq.s32.totalorder %s27, 1
      %p64 = por %p62, %p63
      %p66 = scmp.ne.s32.totalorder %s49, %s65
      %p67 = scmp.eq.s32.totalorder %s27, 0
      %p68 = por %p66, %p67
      %s69 = ssub.s32 %s28, %s40
      %s70 = ssub.s32 %s29, %s36
      %s71 = sor.u32 %s69, %s70
      %p72 = scmp.eq.s32.totalorder %s71, 0
      %s74 = sadd.s32 %s73, 1
      %s75 = scalar_select %p72, %s73, %s74
      %p78 = pneg %p72
      %p79 = scmp.eq.s32.totalorder %s21, 1
      %p80 = por %p78, %p79
      %p81 = scmp.ne.s32.totalorder %s73, %s76
      %p82 = scmp.eq.s32.totalorder %s21, 0
      %p83 = por %p81, %p82
      %p84 = scmp.ne.s32.totalorder %s73, %s76
      %p85 = scmp.eq.s32.totalorder %s26, 1
      %p86 = por %p84, %p85
      %p87 = scmp.ne.s32.totalorder %s76, %s77
      %p88 = scmp.eq.s32.totalorder %s26, 0
      %p89 = por %p87, %p88
      %p90 = scmp.ne.s32.totalorder %s76, %s77
      %p91 = scmp.eq.s32.totalorder %s27, 1
      %p92 = por %p90, %p91
      %p94 = scmp.ne.s32.totalorder %s77, %s93
      %p95 = scmp.eq.s32.totalorder %s27, 0
      %p96 = por %p94, %p95
      %s97 = ssub.s32 %s28, %s40
      %s98 = ssub.s32 %s29, %s36
      %s99 = sor.u32 %s97, %s98
      %p100 = scmp.eq.s32.totalorder %s99, 0
      %s102 = sadd.s32 %s101, 1
      %s103 = scalar_select %p100, %s101, %s102
      %p106 = pneg %p100
      %p107 = scmp.eq.s32.totalorder %s21, 1
      %p108 = por %p106, %p107
      %p109 = scmp.ne.s32.totalorder %s101, %s104
      %p110 = scmp.eq.s32.totalorder %s21, 0
      %p111 = por %p109, %p110
      %p112 = scmp.ne.s32.totalorder %s101, %s104
      %p113 = scmp.eq.s32.totalorder %s26, 1
      %p114 = por %p112, %p113
      %p115 = scmp.ne.s32.totalorder %s104, %s105
      %p116 = scmp.eq.s32.totalorder %s26, 0
      %p117 = por %p115, %p116
      %p118 = scmp.ne.s32.totalorder %s104, %s105
      %p119 = scmp.eq.s32.totalorder %s27, 1
      %p120 = por %p118, %p119
      %p122 = scmp.ne.s32.totalorder %s105, %s121
      %p123 = scmp.eq.s32.totalorder %s27, 0
      %p124 = por %p122, %p123
      %s126 = sadd.s32 %s125, 1
      %p129 = scmp.eq.s32.totalorder %s21, 1
      %p130 = scmp.ne.s32.totalorder %s125, %s127
      %p131 = scmp.eq.s32.totalorder %s21, 0
      %p132 = por %p130, %p131
      %p133 = scmp.ne.s32.totalorder %s125, %s127
      %p134 = scmp.eq.s32.totalorder %s26, 1
      %p135 = por %p133, %p134
      %p136 = scmp.ne.s32.totalorder %s127, %s128
      %p137 = scmp.eq.s32.totalorder %s26, 0
      %p138 = por %p136, %p137
      %p139 = scmp.ne.s32.totalorder %s127, %s128
      %p140 = scmp.eq.s32.totalorder %s27, 1
      %p141 = por %p139, %p140
      %p143 = scmp.ne.s32.totalorder %s128, %s142
      %p144 = scmp.eq.s32.totalorder %s27, 0
      %p145 = por %p143, %p144
      %s147 = sadd.s32 %s146, 1
      %p150 = scmp.eq.s32.totalorder %s21, 1
      %p151 = scmp.ne.s32.totalorder %s146, %s148
      %p152 = scmp.eq.s32.totalorder %s21, 0
      %p153 = por %p151, %p152
      %p154 = scmp.ne.s32.totalorder %s146, %s148
      %p155 = scmp.eq.s32.totalorder %s26, 1
      %p156 = por %p154, %p155
      %p157 = scmp.ne.s32.totalorder %s148, %s149
      %p158 = scmp.eq.s32.totalorder %s26, 0
      %p159 = por %p157, %p158
      %p160 = scmp.ne.s32.totalorder %s148, %s149
      %p161 = scmp.eq.s32.totalorder %s27, 1
      %p162 = por %p160, %p161
      %p164 = scmp.ne.s32.totalorder %s149, %s163
      %p165 = scmp.eq.s32.totalorder %s27, 0
      %p166 = por %p164, %p165
      %s168 = sadd.s32 %s167, 1
      %p171 = scmp.eq.s32.totalorder %s21, 1
      %p172 = scmp.ne.s32.totalorder %s167, %s169
      %p173 = scmp.eq.s32.totalorder %s21, 0
      %p174 = por %p172, %p173
      %p175 = scmp.ne.s32.totalorder %s167, %s169
      %p176 = scmp.eq.s32.totalorder %s26, 1
      %p177 = por %p175, %p176
      %p178 = scmp.ne.s32.totalorder %s169, %s170
      %p179 = scmp.eq.s32.totalorder %s26, 0
      %p180 = por %p178, %p179
      %p181 = scmp.ne.s32.totalorder %s169, %s170
      %p182 = scmp.eq.s32.totalorder %s27, 1
      %p183 = por %p181, %p182
      %p185 = scmp.ne.s32.totalorder %s170, %s184
      %p186 = scmp.eq.s32.totalorder %s27, 0
      %p187 = por %p185, %p186
      %s189 = sadd.s32 %s188, 1
      %p192 = scmp.eq.s32.totalorder %s21, 1
      %p193 = scmp.ne.s32.totalorder %s188, %s190
      %p194 = scmp.eq.s32.totalorder %s21, 0
      %p195 = por %p193, %p194
      %p196 = scmp.ne.s32.totalorder %s188, %s190
      %p197 = scmp.eq.s32.totalorder %s26, 1
      %p198 = por %p196, %p197
      %p199 = scmp.ne.s32.totalorder %s190, %s191
      %p200 = scmp.eq.s32.totalorder %s26, 0
      %p201 = por %p199, %p200
      %p202 = scmp.ne.s32.totalorder %s190, %s191
      %p203 = scmp.eq.s32.totalorder %s27, 1
      %p204 = por %p202, %p203
      %p206 = scmp.ne.s32.totalorder %s191, %s205
      %p207 = scmp.eq.s32.totalorder %s27, 0
      %p208 = por %p206, %p207
      %s209 = ssub.s32 %s28, %s40
      %s210 = ssub.s32 %s29, %s36
      %s211 = sor.u32 %s209, %s210
      %p212 = scmp.eq.s32.totalorder %s211, 0
      %s214 = sadd.s32 %s213, 1
      %s215 = scalar_select %p212, %s213, %s214
      %p218 = pneg %p212
      %p219 = scmp.eq.s32.totalorder %s21, 1
      %p220 = por %p218, %p219
      %p221 = scmp.ne.s32.totalorder %s213, %s216
      %p222 = scmp.eq.s32.totalorder %s21, 0
      %p223 = por %p221, %p222
      %p224 = scmp.ne.s32.totalorder %s213, %s216
      %p225 = scmp.eq.s32.totalorder %s26, 1
      %p226 = por %p224, %p225
      %p227 = scmp.ne.s32.totalorder %s216, %s217
      %p228 = scmp.eq.s32.totalorder %s26, 0
      %p229 = por %p227, %p228
      %p230 = scmp.ne.s32.totalorder %s216, %s217
      %p231 = scmp.eq.s32.totalorder %s27, 1
      %p232 = por %p230, %p231
      %p234 = scmp.ne.s32.totalorder %s217, %s233
      %p235 = scmp.eq.s32.totalorder %s27, 0
      %p236 = por %p234, %p235
      %s237 = ssub.s32 %s28, %s40
      %s238 = ssub.s32 %s29, %s36
      %s239 = sor.u32 %s237, %s238
      %p240 = scmp.eq.s32.totalorder %s239, 0
      %s242 = sadd.s32 %s241, 1
      %s243 = scalar_select %p240, %s241, %s242
      %p246 = pneg %p240
      %p247 = scmp.eq.s32.totalorder %s21, 1
      %p248 = por %p246, %p247
      %p249 = scmp.ne.s32.totalorder %s241, %s244
      %p250 = scmp.eq.s32.totalorder %s21, 0
      %p251 = por %p249, %p250
      %p252 = scmp.ne.s32.totalorder %s241, %s244
      %p253 = scmp.eq.s32.totalorder %s26, 1
      %p254 = por %p252, %p253
      %p255 = scmp.ne.s32.totalorder %s244, %s245
      %p256 = scmp.eq.s32.totalorder %s26, 0
      %p257 = por %p255, %p256
      %p258 = scmp.ne.s32.totalorder %s244, %s245
      %p259 = scmp.eq.s32.totalorder %s27, 1
      %p260 = por %p258, %p259
      %p262 = scmp.ne.s32.totalorder %s245, %s261
      %p263 = scmp.eq.s32.totalorder %s27, 0
      %p264 = por %p262, %p263
      %p265 = scmp.le.s32.totalorder 1, %s21
      %p266 = scmp.lt.s32.totalorder %s21, 3
      %p267 = pnand %p265, %p266
      %p268 = pneg %p267
      // Predicated region
      $region9: #{tpu_custom_call.1} parent=5 // pred_check
        _
      $region10: #{tpu_custom_call.1} parent=5 // pred_check_branch
        %270 = sbr.rel (%p267) target = $region12
      $region11: #{tpu_custom_call.1} parent=5 // pred_region
        %s271 = ssub.s32 %s21, 1
        // Predicated region
        $region13: #{tpu_custom_call.1} parent=11 // pred_check
          %p272 = pneg %p138
        $region14: #{tpu_custom_call.1} parent=11 // pred_check_branch
          %274 = sbr.rel (%p272) target = $region16
        $region15: #{tpu_custom_call.1} parent=11 // pred_region
          _
        $region16: #{tpu_custom_call.1} parent=11 // pred_fallthru
          _
        // Predicated region
        $region17: #{tpu_custom_call.1} parent=11 // pred_check
          %p275 = pneg %p159
        $region18: #{tpu_custom_call.1} parent=11 // pred_check_branch
          %277 = sbr.rel (%p275) target = $region20
        $region19: #{tpu_custom_call.1} parent=11 // pred_region
          _
        $region20: #{tpu_custom_call.1} parent=11 // pred_fallthru
          _
        // Predicated region
        $region21: #{tpu_custom_call.1} parent=11 // pred_check
          %p278 = pneg %p180
        $region22: #{tpu_custom_call.1} parent=11 // pred_check_branch
          %280 = sbr.rel (%p278) target = $region24
        $region23: #{tpu_custom_call.1} parent=11 // pred_region
          _
        $region24: #{tpu_custom_call.1} parent=11 // pred_fallthru
          _
        // Predicated region
        $region25: #{tpu_custom_call.1} parent=11 // pred_check
          %p281 = pneg %p201
        $region26: #{tpu_custom_call.1} parent=11 // pred_check_branch
          %283 = sbr.rel (%p281) target = $region28
        $region27: #{tpu_custom_call.1} parent=11 // pred_region
          _
        $region28: #{tpu_custom_call.1} parent=11 // pred_fallthru
          _
      $region12: #{tpu_custom_call.1} parent=5 // pred_fallthru
        _
      %p284 = scmp.lt.s32.totalorder %s21, 2
      // Predicated region
      $region29: #{tpu_custom_call.1} parent=5 // pred_check
        %p285 = pneg %p284
      $region30: #{tpu_custom_call.1} parent=5 // pred_check_branch
        %287 = sbr.rel (%p285) target = $region32
      $region31: #{tpu_custom_call.1} parent=5 // pred_region
        // Predicated region
        $region33: #{tpu_custom_call.1} parent=31 // pred_check
          %p288 = pneg %p55
        $region34: #{tpu_custom_call.1} parent=31 // pred_check_branch
          %290 = sbr.rel (%p288) target = $region36
        $region35: #{tpu_custom_call.1} parent=31 // pred_region
          %s291 = smul.u32 2, %s29
          %p292 = scmp.lt.s32.totalorder %s28, 1
          %s293 = scalar_select %p292, %s28, 1
          %p294 = scmp.lt.s32.totalorder %s291, 1
          %s295 = scalar_select %p294, %s291, 1
          %s296 = smul.addr %s293, 2
          %s297 = sadd.s32 %s295, %s296
          %s298 = smul.addr %s297, 4
          %s299 = scalar_lea.vmem %s0, %s298
          %s300 = smul.u32 2, %s29
        $region36: #{tpu_custom_call.1} parent=31 // pred_fallthru
          _
        // Predicated region
        $region37: #{tpu_custom_call.1} parent=31 // pred_check
          %p301 = pneg %p83
        $region38: #{tpu_custom_call.1} parent=31 // pred_check_branch
          %303 = sbr.rel (%p301) target = $region40
        $region39: #{tpu_custom_call.1} parent=31 // pred_region
          %s304 = smul.u32 2, %s29
          %p305 = scmp.lt.s32.totalorder %s28, 1
          %s306 = scalar_select %p305, %s28, 1
          %p307 = scmp.lt.s32.totalorder %s304, 1
          %s308 = scalar_select %p307, %s304, 1
          %s309 = smul.addr %s306, 2
          %s310 = sadd.s32 %s308, %s309
          %s311 = smul.addr %s310, 4
          %s312 = scalar_lea.vmem %s1, %s311
          %s313 = smul.u32 2, %s29
        $region40: #{tpu_custom_call.1} parent=31 // pred_fallthru
          _
        // Predicated region
        $region41: #{tpu_custom_call.1} parent=31 // pred_check
          %p314 = pneg %p111
        $region42: #{tpu_custom_call.1} parent=31 // pred_check_branch
          %316 = sbr.rel (%p314) target = $region44
        $region43: #{tpu_custom_call.1} parent=31 // pred_region
          %s317 = smul.u32 2, %s29
          %p318 = scmp.lt.s32.totalorder %s28, 1
          %s319 = scalar_select %p318, %s28, 1
          %p320 = scmp.lt.s32.totalorder %s317, 1
          %s321 = scalar_select %p320, %s317, 1
          %s322 = smul.addr %s319, 2
          %s323 = sadd.s32 %s321, %s322
          %s324 = smul.addr %s323, 4
          %s325 = scalar_lea.vmem %s2, %s324
          %s326 = smul.u32 2, %s29
        $region44: #{tpu_custom_call.1} parent=31 // pred_fallthru
          _
      $region32: #{tpu_custom_call.1} parent=5 // pred_fallthru
        _
      %p327 = scmp.le.s32.totalorder 1, %s21
      %p328 = scmp.lt.s32.totalorder %s21, 3
      %p329 = pnand %p327, %p328
      %p330 = pneg %p329
      // Predicated region
      $region45: #{tpu_custom_call.1} parent=5 // pred_check
        _
      $region46: #{tpu_custom_call.1} parent=5 // pred_check_branch
        %332 = sbr.rel (%p329) target = $region48
      $region47: #{tpu_custom_call.1} parent=5 // pred_region
        %s333 = ssub.s32 %s21, 1
        %s334 = smul.u32 2, %s31
        %p335 = scmp.lt.s32.totalorder %s30, 1
        %s336 = scalar_select %p335, %s30, 1
        %p337 = scmp.lt.s32.totalorder %s334, 1
        %s338 = scalar_select %p337, %s334, 1
        %s339 = smul.addr %s336, 2
        %s340 = sadd.s32 %s338, %s339
        %s341 = smul.addr %s340, 4
        %s342 = scalar_lea.vmem %s0, %s341
        %p343 = pneg %p61
        %p344 = pneg %p58
        %s345 = smul.u32 2, %s31
        %p346 = scmp.lt.s32.totalorder %s30, 1
        %s347 = scalar_select %p346, %s30, 1
        %p348 = scmp.lt.s32.totalorder %s345, 1
        %s349 = scalar_select %p348, %s345, 1
        %s350 = smul.addr %s347, 2
        %s351 = sadd.s32 %s349, %s350
        %s352 = smul.addr %s351, 4
        %s353 = scalar_lea.vmem %s1, %s352
        %p354 = pneg %p89
        %p355 = pneg %p86
        %s356 = smul.u32 2, %s31
        %p357 = scmp.lt.s32.totalorder %s30, 1
        %s358 = scalar_select %p357, %s30, 1
        %p359 = scmp.lt.s32.totalorder %s356, 1
        %s360 = scalar_select %p359, %s356, 1
        %s361 = smul.addr %s358, 2
        %s362 = sadd.s32 %s360, %s361
        %s363 = smul.addr %s362, 4
        %s364 = scalar_lea.vmem %s2, %s363
        %p365 = pneg %p117
        %p366 = pneg %p114
        %p367 = pneg %p138
        %p368 = pneg %p135
        %p369 = pneg %p159
        %p370 = pneg %p156
        %p371 = pneg %p180
        %p372 = pneg %p177
        %p373 = pneg %p201
        %p374 = pneg %p198
        %p375 = pneg %p229
        %p376 = pneg %p226
        %s377 = sand.u32 %s216, 1
        %s378 = scalar_lea.sflag [#allocation3], %s377
        %s379 = sand.u32 %s216, 1
        %s380 = smul.addr %s379, 16
        %s381 = scalar_lea.vmem [#allocation2], %s380
        %p382 = pneg %p257
        %p383 = pneg %p254
        %s384 = sand.u32 %s244, 1
        %s385 = scalar_lea.sflag [#allocation5], %s384
        %s386 = sand.u32 %s244, 1
        %s387 = smul.addr %s386, 16
        %s388 = scalar_lea.vmem [#allocation4], %s387
        %s389 = smul.u32 2, %s31
        %p390 = scmp.lt.s32.totalorder %s30, 1
        %s391 = scalar_select %p390, %s30, 1
        %p392 = scmp.lt.s32.totalorder %s389, 1
        %s393 = scalar_select %p392, %s389, 1
        %s394 = smul.addr %s391, 2
        %s395 = sadd.s32 %s393, %s394
        %s396 = smul.addr %s395, 4
        %s397 = scalar_lea.vmem %s0, %s396
        %s398 = smul.u32 2, %s31
        %s399 = smul.u32 2, %s31
        %p400 = scmp.lt.s32.totalorder %s30, 1
        %s401 = scalar_select %p400, %s30, 1
        %p402 = scmp.lt.s32.totalorder %s399, 1
        %s403 = scalar_select %p402, %s399, 1
        %s404 = smul.addr %s401, 2
        %s405 = sadd.s32 %s403, %s404
        %s406 = smul.addr %s405, 4
        %s407 = scalar_lea.vmem %s1, %s406
        %s408 = smul.u32 2, %s31
        %s409 = smul.u32 2, %s31
        %p410 = scmp.lt.s32.totalorder %s30, 1
        %s411 = scalar_select %p410, %s30, 1
        %p412 = scmp.lt.s32.totalorder %s409, 1
        %s413 = scalar_select %p412, %s409, 1
        %s414 = smul.addr %s411, 2
        %s415 = sadd.s32 %s413, %s414
        %s416 = smul.addr %s415, 4
        %s417 = scalar_lea.vmem %s2, %s416
        %s418 = smul.u32 2, %s31
        %s419 = smul.u32 2, %s31
        %s420 = smul.u32 2, %s31
        %v421 = vld [vmem:[%s397] sm:$0xff]
        %v422 = vld [vmem:[%s407] sm:$0xff]
        %v423 = vadd.f32 %v421, %v422
        %v424 = vld [vmem:[%s3] sm:$0xff]
        %v425 = vld [vmem:[%s3 + $0x8] sm:$0xff]
        %v426 = vld [vmem:[%s3 + $0x10] sm:$0xff]
        %v427 = vld [vmem:[%s3 + $0x18] sm:$0xff]
        %v428 = vld [vmem:[%s4] sm:$0xff]
        %v429 = vld [vmem:[%s4 + $0x8] sm:$0xff]
        %v430 = vld [vmem:[%s4 + $0x10] sm:$0xff]
        %v431 = vld [vmem:[%s4 + $0x18] sm:$0xff]
        %433 = vset.pattern.permute.xlu0 0
        %434 = vperm.xlu0 %433, %v428
        %v435 = vpop.permute.xlu0 %434
        %438 = vset.pattern.permute.xlu0 0
        %439 = vperm.xlu0 %438, %v429
        %v440 = vpop.permute.xlu0 %439
        %443 = vset.pattern.permute.xlu0 0
        %444 = vperm.xlu0 %443, %v430
        %v445 = vpop.permute.xlu0 %444
        %448 = vset.pattern.permute.xlu0 0
        %449 = vperm.xlu0 %448, %v431
        %v450 = vpop.permute.xlu0 %449
        %v453 = vcombine.high %v423, %v423
        %vm454 = vcmask 31744
        %v456 = vsel %vm454, %v424, 0
        %v459 = vsel %vm454, %v425, 0
        %v462 = vsel %vm454, %v426, 0
        %v465 = vsel %vm454, %v427, 0
        %vm467 = vcmask 1043456
        %v468 = vsel %vm467, %v423, 0
        %v470 = vsel %vm467, %v453, 0
        %v472 = vand.u32 %v470, 4294901760
        %473 = vmatprep.subr.mxu0 %v472
        %v474 = vand.u32 %v468, 4294901760
        %475 = vmatpush1.msra.mxu0 %v474
        %476 = vmatprep.subr.mxu0 0.0
        %477 = vmatpush1.msra.mxu0 0.0
        %478 = vmatprep.subr.mxu0 0.0
        %479 = vmatpush1.msra.mxu0 0.0
        %480 = vmatprep.subr.mxu0 0.0
        %481 = vmatpush1.msra.mxu0 0.0
        %482 = vmatprep.subr.mxu0 0.0
        %483 = vmatpush1.msra.mxu0 0.0
        %484 = vmatprep.subr.mxu0 0.0
        %485 = vmatpush1.msra.mxu0 0.0
        %486 = vmatprep.subr.mxu0 0.0
        %487 = vmatpush1.msra.mxu0 0.0
        %488 = vmatprep.subr.mxu0 0.0
        %489 = vmatpush1.msra.mxu0 0.0
        %490 = vmatprep.subr.mxu0 0.0
        %491 = vmatpush1.msra.mxu0 0.0
        %492 = vmatprep.subr.mxu0 0.0
        %493 = vmatpush1.msra.mxu0 0.0
        %494 = vmatprep.subr.mxu0 0.0
        %495 = vmatpush1.msra.mxu0 0.0
        %496 = vmatprep.subr.mxu0 0.0
        %497 = vmatpush1.msra.mxu0 0.0
        %498 = vmatprep.subr.mxu0 0.0
        %499 = vmatpush1.msra.mxu0 0.0
        %500 = vmatprep.subr.mxu0 0.0
        %501 = vmatpush1.msra.mxu0 0.0
        %502 = vmatprep.subr.mxu0 0.0
        %503 = vmatpush1.msra.mxu0 0.0
        %504 = vmatprep.subr.mxu0 0.0
        %505 = vmatpush1.msra.mxu0 0.0
        %506 = vmatprep.subr.mxu0 0.0
        %507 = vmatpush1.msra.mxu0 0.0
        %508 = vmatprep.subr.mxu0 0.0
        %509 = vmatpush1.msra.mxu0 0.0
        %510 = vmatprep.subr.mxu0 0.0
        %511 = vmatpush1.msra.mxu0 0.0
        %512 = vmatprep.subr.mxu0 0.0
        %513 = vmatpush1.msra.mxu0 0.0
        %514 = vmatprep.subr.mxu0 0.0
        %515 = vmatpush1.msra.mxu0 0.0
        %516 = vmatprep.subr.mxu0 0.0
        %517 = vmatpush1.msra.mxu0 0.0
        %518 = vmatprep.subr.mxu0 0.0
        %519 = vmatpush1.msra.mxu0 0.0
        %520 = vmatprep.subr.mxu0 0.0
        %521 = vmatpush1.msra.mxu0 0.0
        %522 = vmatprep.subr.mxu0 0.0
        %523 = vmatpush1.msra.mxu0 0.0
        %524 = vmatprep.subr.mxu0 0.0
        %525 = vmatpush1.msra.mxu0 0.0
        %526 = vmatprep.subr.mxu0 0.0
        %527 = vmatpush1.msra.mxu0 0.0
        %528 = vmatprep.subr.mxu0 0.0
        %529 = vmatpush1.msra.mxu0 0.0
        %530 = vmatprep.subr.mxu0 0.0
        %531 = vmatpush1.msra.mxu0 0.0
        %532 = vmatprep.subr.mxu0 0.0
        %533 = vmatpush1.msra.mxu0 0.0
        %534 = vmatprep.subr.mxu0 0.0
        %535 = vmatpush1.msra.mxu0 0.0
        %536 = vmatprep.subr.mxu0 0.0
        %537 = vmatpush1.msra.mxu0 0.0
        %538 = vmatprep.mubr.f32.mxu0 0.0
        %v539 = vand.u32 %v456, 4294901760
        %v540 = vsub.f32 %v456, %v539
        %v541 = vand.u32 %v540, 4294901760
        %v542 = vsub.f32 %v540, %v541
        %v543 = vand.u32 %v542, 4294901760
        %544 = vmatmul.mubr.f32.gmra.mrb[0].mxu0 %v543
        %v545 = vpop.f32.mrb[0].mxu0
        %v546 = vadd.f32 %v435, %v545
        %v547 = vpop.f32.mrb[0].mxu0
        %v548 = vadd.f32 %v435, %v547
        %549 = vmatprep.mubr.f32.mxu0 0.0
        %v550 = vand.u32 %v459, 4294901760
        %v551 = vsub.f32 %v459, %v550
        %v552 = vand.u32 %v551, 4294901760
        %v553 = vsub.f32 %v551, %v552
        %v554 = vand.u32 %v553, 4294901760
        %555 = vmatmul.mubr.f32.gmra.mrb[0].mxu0 %v554
        %v556 = vpop.f32.mrb[0].mxu0
        %v557 = vadd.f32 %v440, %v556
        %v558 = vpop.f32.mrb[0].mxu0
        %v559 = vadd.f32 %v440, %v558
        %560 = vmatprep.mubr.f32.mxu0 0.0
        %v561 = vand.u32 %v462, 4294901760
        %v562 = vsub.f32 %v462, %v561
        %v563 = vand.u32 %v562, 4294901760
        %v564 = vsub.f32 %v562, %v563
        %v565 = vand.u32 %v564, 4294901760
        %566 = vmatmul.mubr.f32.gmra.mrb[0].mxu0 %v565
        %v567 = vpop.f32.mrb[0].mxu0
        %v568 = vadd.f32 %v445, %v567
        %v569 = vpop.f32.mrb[0].mxu0
        %v570 = vadd.f32 %v445, %v569
        %571 = vmatprep.mubr.f32.mxu0 0.0
        %v572 = vand.u32 %v465, 4294901760
        %v573 = vsub.f32 %v465, %v572
        %v574 = vand.u32 %v573, 4294901760
        %v575 = vsub.f32 %v573, %v574
        %v576 = vand.u32 %v575, 4294901760
        %577 = vmatmul.mubr.f32.gmra.mrb[0].mxu0 %v576
        %v578 = vpop.f32.mrb[0].mxu0
        %v579 = vadd.f32 %v450, %v578
        %v580 = vpop.f32.mrb[0].mxu0
        %v581 = vadd.f32 %v450, %v580
        %582 = vdwg.mxu0
        %v583 = vand.u32 %v470, 4294901760
        %v584 = vsub.f32 %v470, %v583
        %v585 = vand.u32 %v584, 4294901760
        %v586 = vsub.f32 %v584, %v585
        %v587 = vand.u32 %v586, 4294901760
        %588 = vmatprep.subr.mxu0 %v587
        %v589 = vand.u32 %v468, 4294901760
        %v590 = vsub.f32 %v468, %v589
        %v591 = vand.u32 %v590, 4294901760
        %v592 = vsub.f32 %v590, %v591
        %v593 = vand.u32 %v592, 4294901760
        %594 = vmatpush1.msra.mxu0 %v593
        %595 = vmatprep.subr.mxu0 0.0
        %596 = vmatpush1.msra.mxu0 0.0
        %597 = vmatprep.subr.mxu0 0.0
        %598 = vmatpush1.msra.mxu0 0.0
        %599 = vmatprep.subr.mxu0 0.0
        %600 = vmatpush1.msra.mxu0 0.0
        %601 = vmatprep.subr.mxu0 0.0
        %602 = vmatpush1.msra.mxu0 0.0
        %603 = vmatprep.subr.mxu0 0.0
        %604 = vmatpush1.msra.mxu0 0.0
        %605 = vmatprep.subr.mxu0 0.0
        %606 = vmatpush1.msra.mxu0 0.0
        %607 = vmatprep.subr.mxu0 0.0
        %608 = vmatpush1.msra.mxu0 0.0
        %609 = vmatprep.subr.mxu0 0.0
        %610 = vmatpush1.msra.mxu0 0.0
        %611 = vmatprep.subr.mxu0 0.0
        %612 = vmatpush1.msra.mxu0 0.0
        %613 = vmatprep.subr.mxu0 0.0
        %614 = vmatpush1.msra.mxu0 0.0
        %615 = vmatprep.subr.mxu0 0.0
        %616 = vmatpush1.msra.mxu0 0.0
        %617 = vmatprep.subr.mxu0 0.0
        %618 = vmatpush1.msra.mxu0 0.0
        %619 = vmatprep.subr.mxu0 0.0
        %620 = vmatpush1.msra.mxu0 0.0
        %621 = vmatprep.subr.mxu0 0.0
        %622 = vmatpush1.msra.mxu0 0.0
        %623 = vmatprep.subr.mxu0 0.0
        %624 = vmatpush1.msra.mxu0 0.0
        %625 = vmatprep.subr.mxu0 0.0
        %626 = vmatpush1.msra.mxu0 0.0
        %627 = vmatprep.subr.mxu0 0.0
        %628 = vmatpush1.msra.mxu0 0.0
        %629 = vmatprep.subr.mxu0 0.0
        %630 = vmatpush1.msra.mxu0 0.0
        %631 = vmatprep.subr.mxu0 0.0
        %632 = vmatpush1.msra.mxu0 0.0
        %633 = vmatprep.subr.mxu0 0.0
        %634 = vmatpush1.msra.mxu0 0.0
        %635 = vmatprep.subr.mxu0 0.0
        %636 = vmatpush1.msra.mxu0 0.0
        %637 = vmatprep.subr.mxu0 0.0
        %638 = vmatpush1.msra.mxu0 0.0
        %639 = vmatprep.subr.mxu0 0.0
        %640 = vmatpush1.msra.mxu0 0.0
        %641 = vmatprep.subr.mxu0 0.0
        %642 = vmatpush1.msra.mxu0 0.0
        %643 = vmatprep.subr.mxu0 0.0
        %644 = vmatpush1.msra.mxu0 0.0
        %645 = vmatprep.subr.mxu0 0.0
        %646 = vmatpush1.msra.mxu0 0.0
        %647 = vmatprep.subr.mxu0 0.0
        %648 = vmatpush1.msra.mxu0 0.0
        %649 = vmatprep.subr.mxu0 0.0
        %650 = vmatpush1.msra.mxu0 0.0
        %651 = vmatprep.subr.mxu0 0.0
        %652 = vmatpush1.msra.mxu0 0.0
        %653 = vmatprep.subr.mxu0 0.0
        %654 = vmatpush1.msra.mxu0 0.0
        %655 = vmatprep.subr.mxu0 0.0
        %656 = vmatpush1.msra.mxu0 0.0
        %657 = vmatprep.mubr.f32.mxu0 0.0
        %v658 = vand.u32 %v456, 4294901760
        %659 = vmatmul.mubr.f32.gmra.mrb[0].mxu0 %v658
        %v660 = vpop.f32.mrb[0].mxu0
        %v661 = vadd.f32 %v546, %v660
        %v662 = vpop.f32.mrb[0].mxu0
        %v663 = vadd.f32 %v548, %v662
        %664 = vmatprep.mubr.f32.mxu0 0.0
        %v665 = vand.u32 %v459, 4294901760
        %666 = vmatmul.mubr.f32.gmra.mrb[0].mxu0 %v665
        %v667 = vpop.f32.mrb[0].mxu0
        %v668 = vadd.f32 %v557, %v667
        %v669 = vpop.f32.mrb[0].mxu0
        %v670 = vadd.f32 %v559, %v669
        %671 = vmatprep.mubr.f32.mxu0 0.0
        %v672 = vand.u32 %v462, 4294901760
        %673 = vmatmul.mubr.f32.gmra.mrb[0].mxu0 %v672
        %v674 = vpop.f32.mrb[0].mxu0
        %v675 = vadd.f32 %v568, %v674
        %v676 = vpop.f32.mrb[0].mxu0
        %v677 = vadd.f32 %v570, %v676
        %678 = vmatprep.mubr.f32.mxu0 0.0
        %v679 = vand.u32 %v465, 4294901760
        %680 = vmatmul.mubr.f32.gmra.mrb[0].mxu0 %v679
        %v681 = vpop.f32.mrb[0].mxu0
        %v682 = vadd.f32 %v579, %v681
        %v683 = vpop.f32.mrb[0].mxu0
        %v684 = vadd.f32 %v581, %v683
        %685 = vdwg.mxu0
        %v686 = vand.u32 %v470, 4294901760
        %v687 = vsub.f32 %v470, %v686
        %688 = vmatprep.subr.mxu0 %v687
        %v689 = vand.u32 %v468, 4294901760
        %v690 = vsub.f32 %v468, %v689
        %691 = vmatpush1.msra.mxu0 %v690
        %692 = vmatprep.subr.mxu0 0.0
        %693 = vmatpush1.msra.mxu0 0.0
        %694 = vmatprep.subr.mxu0 0.0
        %695 = vmatpush1.msra.mxu0 0.0
        %696 = vmatprep.subr.mxu0 0.0
        %697 = vmatpush1.msra.mxu0 0.0
        %698 = vmatprep.subr.mxu0 0.0
        %699 = vmatpush1.msra.mxu0 0.0
        %700 = vmatprep.subr.mxu0 0.0
        %701 = vmatpush1.msra.mxu0 0.0
        %702 = vmatprep.subr.mxu0 0.0
        %703 = vmatpush1.msra.mxu0 0.0
        %704 = vmatprep.subr.mxu0 0.0
        %705 = vmatpush1.msra.mxu0 0.0
        %706 = vmatprep.subr.mxu0 0.0
        %707 = vmatpush1.msra.mxu0 0.0
        %708 = vmatprep.subr.mxu0 0.0
        %709 = vmatpush1.msra.mxu0 0.0
        %710 = vmatprep.subr.mxu0 0.0
        %711 = vmatpush1.msra.mxu0 0.0
        %712 = vmatprep.subr.mxu0 0.0
        %713 = vmatpush1.msra.mxu0 0.0
        %714 = vmatprep.subr.mxu0 0.0
        %715 = vmatpush1.msra.mxu0 0.0
        %716 = vmatprep.subr.mxu0 0.0
        %717 = vmatpush1.msra.mxu0 0.0
        %718 = vmatprep.subr.mxu0 0.0
        %719 = vmatpush1.msra.mxu0 0.0
        %720 = vmatprep.subr.mxu0 0.0
        %721 = vmatpush1.msra.mxu0 0.0
        %722 = vmatprep.subr.mxu0 0.0
        %723 = vmatpush1.msra.mxu0 0.0
        %724 = vmatprep.subr.mxu0 0.0
        %725 = vmatpush1.msra.mxu0 0.0
        %726 = vmatprep.subr.mxu0 0.0
        %727 = vmatpush1.msra.mxu0 0.0
        %728 = vmatprep.subr.mxu0 0.0
        %729 = vmatpush1.msra.mxu0 0.0
        %730 = vmatprep.subr.mxu0 0.0
        %731 = vmatpush1.msra.mxu0 0.0
        %732 = vmatprep.subr.mxu0 0.0
        %733 = vmatpush1.msra.mxu0 0.0
        %734 = vmatprep.subr.mxu0 0.0
        %735 = vmatpush1.msra.mxu0 0.0
        %736 = vmatprep.subr.mxu0 0.0
        %737 = vmatpush1.msra.mxu0 0.0
        %738 = vmatprep.subr.mxu0 0.0
        %739 = vmatpush1.msra.mxu0 0.0
        %740 = vmatprep.subr.mxu0 0.0
        %741 = vmatpush1.msra.mxu0 0.0
        %742 = vmatprep.subr.mxu0 0.0
        %743 = vmatpush1.msra.mxu0 0.0
        %744 = vmatprep.subr.mxu0 0.0
        %745 = vmatpush1.msra.mxu0 0.0
        %746 = vmatprep.subr.mxu0 0.0
        %747 = vmatpush1.msra.mxu0 0.0
        %748 = vmatprep.subr.mxu0 0.0
        %749 = vmatpush1.msra.mxu0 0.0
        %750 = vmatprep.subr.mxu0 0.0
        %751 = vmatpush1.msra.mxu0 0.0
        %752 = vmatprep.subr.mxu0 0.0
        %753 = vmatpush1.msra.mxu0 0.0
        %754 = vmatprep.mubr.f32.mxu0 0.0
        %v755 = vand.u32 %v456, 4294901760
        %v756 = vsub.f32 %v456, %v755
        %757 = vmatmul.mubr.f32.gmra.mrb[0].mxu0 %v756
        %v758 = vpop.f32.mrb[0].mxu0
        %v759 = vadd.f32 %v661, %v758
        %v760 = vpop.f32.mrb[0].mxu0
        %v761 = vadd.f32 %v663, %v760
        %762 = vmatprep.mubr.f32.mxu0 0.0
        %v763 = vand.u32 %v459, 4294901760
        %v764 = vsub.f32 %v459, %v763
        %765 = vmatmul.mubr.f32.gmra.mrb[0].mxu0 %v764
        %v766 = vpop.f32.mrb[0].mxu0
        %v767 = vadd.f32 %v668, %v766
        %v768 = vpop.f32.mrb[0].mxu0
        %v769 = vadd.f32 %v670, %v768
        %770 = vmatprep.mubr.f32.mxu0 0.0
        %v771 = vand.u32 %v462, 4294901760
        %v772 = vsub.f32 %v462, %v771
        %773 = vmatmul.mubr.f32.gmra.mrb[0].mxu0 %v772
        %v774 = vpop.f32.mrb[0].mxu0
        %v775 = vadd.f32 %v675, %v774
        %v776 = vpop.f32.mrb[0].mxu0
        %v777 = vadd.f32 %v677, %v776
        %778 = vmatprep.mubr.f32.mxu0 0.0
        %v779 = vand.u32 %v465, 4294901760
        %v780 = vsub.f32 %v465, %v779
        %781 = vmatmul.mubr.f32.gmra.mrb[0].mxu0 %v780
        %v782 = vpop.f32.mrb[0].mxu0
        %v783 = vadd.f32 %v682, %v782
        %v784 = vpop.f32.mrb[0].mxu0
        %v785 = vadd.f32 %v684, %v784
        %786 = vdwg.mxu0
        %v787 = vand.u32 %v470, 4294901760
        %788 = vmatprep.subr.mxu0 %v787
        %v789 = vand.u32 %v468, 4294901760
        %790 = vmatpush1.msra.mxu0 %v789
        %791 = vmatprep.subr.mxu0 0.0
        %792 = vmatpush1.msra.mxu0 0.0
        %793 = vmatprep.subr.mxu0 0.0
        %794 = vmatpush1.msra.mxu0 0.0
        %795 = vmatprep.subr.mxu0 0.0
        %796 = vmatpush1.msra.mxu0 0.0
        %797 = vmatprep.subr.mxu0 0.0
        %798 = vmatpush1.msra.mxu0 0.0
        %799 = vmatprep.subr.mxu0 0.0
        %800 = vmatpush1.msra.mxu0 0.0
        %801 = vmatprep.subr.mxu0 0.0
        %802 = vmatpush1.msra.mxu0 0.0
        %803 = vmatprep.subr.mxu0 0.0
        %804 = vmatpush1.msra.mxu0 0.0
        %805 = vmatprep.subr.mxu0 0.0
        %806 = vmatpush1.msra.mxu0 0.0
        %807 = vmatprep.subr.mxu0 0.0
        %808 = vmatpush1.msra.mxu0 0.0
        %809 = vmatprep.subr.mxu0 0.0
        %810 = vmatpush1.msra.mxu0 0.0
        %811 = vmatprep.subr.mxu0 0.0
        %812 = vmatpush1.msra.mxu0 0.0
        %813 = vmatprep.subr.mxu0 0.0
        %814 = vmatpush1.msra.mxu0 0.0
        %815 = vmatprep.subr.mxu0 0.0
        %816 = vmatpush1.msra.mxu0 0.0
        %817 = vmatprep.subr.mxu0 0.0
        %818 = vmatpush1.msra.mxu0 0.0
        %819 = vmatprep.subr.mxu0 0.0
        %820 = vmatpush1.msra.mxu0 0.0
        %821 = vmatprep.subr.mxu0 0.0
        %822 = vmatpush1.msra.mxu0 0.0
        %823 = vmatprep.subr.mxu0 0.0
        %824 = vmatpush1.msra.mxu0 0.0
        %825 = vmatprep.subr.mxu0 0.0
        %826 = vmatpush1.msra.mxu0 0.0
        %827 = vmatprep.subr.mxu0 0.0
        %828 = vmatpush1.msra.mxu0 0.0
        %829 = vmatprep.subr.mxu0 0.0
        %830 = vmatpush1.msra.mxu0 0.0
        %831 = vmatprep.subr.mxu0 0.0
        %832 = vmatpush1.msra.mxu0 0.0
        %833 = vmatprep.subr.mxu0 0.0
        %834 = vmatpush1.msra.mxu0 0.0
        %835 = vmatprep.subr.mxu0 0.0
        %836 = vmatpush1.msra.mxu0 0.0
        %837 = vmatprep.subr.mxu0 0.0
        %838 = vmatpush1.msra.mxu0 0.0
        %839 = vmatprep.subr.mxu0 0.0
        %840 = vmatpush1.msra.mxu0 0.0
        %841 = vmatprep.subr.mxu0 0.0
        %842 = vmatpush1.msra.mxu0 0.0
        %843 = vmatprep.subr.mxu0 0.0
        %844 = vmatpush1.msra.mxu0 0.0
        %845 = vmatprep.subr.mxu0 0.0
        %846 = vmatpush1.msra.mxu0 0.0
        %847 = vmatprep.subr.mxu0 0.0
        %848 = vmatpush1.msra.mxu0 0.0
        %849 = vmatprep.subr.mxu0 0.0
        %850 = vmatpush1.msra.mxu0 0.0
        %851 = vmatprep.subr.mxu0 0.0
        %852 = vmatpush1.msra.mxu0 0.0
        %853 = vmatprep.mubr.f32.mxu0 0.0
        %v854 = vand.u32 %v456, 4294901760
        %v855 = vsub.f32 %v456, %v854
        %v856 = vand.u32 %v855, 4294901760
        %857 = vmatmul.mubr.f32.gmra.mrb[0].mxu0 %v856
        %v858 = vpop.f32.mrb[0].mxu0
        %v859 = vadd.f32 %v759, %v858
        %v860 = vpop.f32.mrb[0].mxu0
        %v861 = vadd.f32 %v761, %v860
        %862 = vmatprep.mubr.f32.mxu0 0.0
        %v863 = vand.u32 %v459, 4294901760
        %v864 = vsub.f32 %v459, %v863
        %v865 = vand.u32 %v864, 4294901760
        %866 = vmatmul.mubr.f32.gmra.mrb[0].mxu0 %v865
        %v867 = vpop.f32.mrb[0].mxu0
        %v868 = vadd.f32 %v767, %v867
        %v869 = vpop.f32.mrb[0].mxu0
        %v870 = vadd.f32 %v769, %v869
        %871 = vmatprep.mubr.f32.mxu0 0.0
        %v872 = vand.u32 %v462, 4294901760
        %v873 = vsub.f32 %v462, %v872
        %v874 = vand.u32 %v873, 4294901760
        %875 = vmatmul.mubr.f32.gmra.mrb[0].mxu0 %v874
        %v876 = vpop.f32.mrb[0].mxu0
        %v877 = vadd.f32 %v775, %v876
        %v878 = vpop.f32.mrb[0].mxu0
        %v879 = vadd.f32 %v777, %v878
        %880 = vmatprep.mubr.f32.mxu0 0.0
        %v881 = vand.u32 %v465, 4294901760
        %v882 = vsub.f32 %v465, %v881
        %v883 = vand.u32 %v882, 4294901760
        %884 = vmatmul.mubr.f32.gmra.mrb[0].mxu0 %v883
        %v885 = vpop.f32.mrb[0].mxu0
        %v886 = vadd.f32 %v783, %v885
        %v887 = vpop.f32.mrb[0].mxu0
        %v888 = vadd.f32 %v785, %v887
        %889 = vdwg.mxu0
        %v890 = vand.u32 %v470, 4294901760
        %v891 = vsub.f32 %v470, %v890
        %v892 = vand.u32 %v891, 4294901760
        %893 = vmatprep.subr.mxu0 %v892
        %v894 = vand.u32 %v468, 4294901760
        %v895 = vsub.f32 %v468, %v894
        %v896 = vand.u32 %v895, 4294901760
        %897 = vmatpush1.msra.mxu0 %v896
        %898 = vmatprep.subr.mxu0 0.0
        %899 = vmatpush1.msra.mxu0 0.0
        %900 = vmatprep.subr.mxu0 0.0
        %901 = vmatpush1.msra.mxu0 0.0
        %902 = vmatprep.subr.mxu0 0.0
        %903 = vmatpush1.msra.mxu0 0.0
        %904 = vmatprep.subr.mxu0 0.0
        %905 = vmatpush1.msra.mxu0 0.0
        %906 = vmatprep.subr.mxu0 0.0
        %907 = vmatpush1.msra.mxu0 0.0
        %908 = vmatprep.subr.mxu0 0.0
        %909 = vmatpush1.msra.mxu0 0.0
        %910 = vmatprep.subr.mxu0 0.0
        %911 = vmatpush1.msra.mxu0 0.0
        %912 = vmatprep.subr.mxu0 0.0
        %913 = vmatpush1.msra.mxu0 0.0
        %914 = vmatprep.subr.mxu0 0.0
        %915 = vmatpush1.msra.mxu0 0.0
        %916 = vmatprep.subr.mxu0 0.0
        %917 = vmatpush1.msra.mxu0 0.0
        %918 = vmatprep.subr.mxu0 0.0
        %919 = vmatpush1.msra.mxu0 0.0
        %920 = vmatprep.subr.mxu0 0.0
        %921 = vmatpush1.msra.mxu0 0.0
        %922 = vmatprep.subr.mxu0 0.0
        %923 = vmatpush1.msra.mxu0 0.0
        %924 = vmatprep.subr.mxu0 0.0
        %925 = vmatpush1.msra.mxu0 0.0
        %926 = vmatprep.subr.mxu0 0.0
        %927 = vmatpush1.msra.mxu0 0.0
        %928 = vmatprep.subr.mxu0 0.0
        %929 = vmatpush1.msra.mxu0 0.0
        %930 = vmatprep.subr.mxu0 0.0
        %931 = vmatpush1.msra.mxu0 0.0
        %932 = vmatprep.subr.mxu0 0.0
        %933 = vmatpush1.msra.mxu0 0.0
        %934 = vmatprep.subr.mxu0 0.0
        %935 = vmatpush1.msra.mxu0 0.0
        %936 = vmatprep.subr.mxu0 0.0
        %937 = vmatpush1.msra.mxu0 0.0
        %938 = vmatprep.subr.mxu0 0.0
        %939 = vmatpush1.msra.mxu0 0.0
        %940 = vmatprep.subr.mxu0 0.0
        %941 = vmatpush1.msra.mxu0 0.0
        %942 = vmatprep.subr.mxu0 0.0
        %943 = vmatpush1.msra.mxu0 0.0
        %944 = vmatprep.subr.mxu0 0.0
        %945 = vmatpush1.msra.mxu0 0.0
        %946 = vmatprep.subr.mxu0 0.0
        %947 = vmatpush1.msra.mxu0 0.0
        %948 = vmatprep.subr.mxu0 0.0
        %949 = vmatpush1.msra.mxu0 0.0
        %950 = vmatprep.subr.mxu0 0.0
        %951 = vmatpush1.msra.mxu0 0.0
        %952 = vmatprep.subr.mxu0 0.0
        %953 = vmatpush1.msra.mxu0 0.0
        %954 = vmatprep.subr.mxu0 0.0
        %955 = vmatpush1.msra.mxu0 0.0
        %956 = vmatprep.subr.mxu0 0.0
        %957 = vmatpush1.msra.mxu0 0.0
        %958 = vmatprep.subr.mxu0 0.0
        %959 = vmatpush1.msra.mxu0 0.0
        %960 = vmatprep.mubr.f32.mxu0 0.0
        %v961 = vand.u32 %v456, 4294901760
        %962 = vmatmul.mubr.f32.gmra.mrb[0].mxu0 %v961
        %v963 = vpop.f32.mrb[0].mxu0
        %v964 = vadd.f32 %v859, %v963
        %v965 = vpop.f32.mrb[0].mxu0
        %v966 = vadd.f32 %v861, %v965
        %967 = vmatprep.mubr.f32.mxu0 0.0
        %v968 = vand.u32 %v459, 4294901760
        %969 = vmatmul.mubr.f32.gmra.mrb[0].mxu0 %v968
        %v970 = vpop.f32.mrb[0].mxu0
        %v971 = vadd.f32 %v868, %v970
        %v972 = vpop.f32.mrb[0].mxu0
        %v973 = vadd.f32 %v870, %v972
        %974 = vmatprep.mubr.f32.mxu0 0.0
        %v975 = vand.u32 %v462, 4294901760
        %976 = vmatmul.mubr.f32.gmra.mrb[0].mxu0 %v975
        %v977 = vpop.f32.mrb[0].mxu0
        %v978 = vadd.f32 %v877, %v977
        %v979 = vpop.f32.mrb[0].mxu0
        %v980 = vadd.f32 %v879, %v979
        %981 = vmatprep.mubr.f32.mxu0 0.0
        %v982 = vand.u32 %v465, 4294901760
        %983 = vmatmul.mubr.f32.gmra.mrb[0].mxu0 %v982
        %v984 = vpop.f32.mrb[0].mxu0
        %v985 = vadd.f32 %v886, %v984
        %v986 = vpop.f32.mrb[0].mxu0
        %v987 = vadd.f32 %v888, %v986
        %988 = vdwg.mxu0
        %v989 = vand.u32 %v470, 4294901760
        %990 = vmatprep.subr.mxu0 %v989
        %v991 = vand.u32 %v468, 4294901760
        %992 = vmatpush1.msra.mxu0 %v991
        %993 = vmatprep.subr.mxu0 0.0
        %994 = vmatpush1.msra.mxu0 0.0
        %995 = vmatprep.subr.mxu0 0.0
        %996 = vmatpush1.msra.mxu0 0.0
        %997 = vmatprep.subr.mxu0 0.0
        %998 = vmatpush1.msra.mxu0 0.0
        %999 = vmatprep.subr.mxu0 0.0
        %1000 = vmatpush1.msra.mxu0 0.0
        %1001 = vmatprep.subr.mxu0 0.0
        %1002 = vmatpush1.msra.mxu0 0.0
        %1003 = vmatprep.subr.mxu0 0.0
        %1004 = vmatpush1.msra.mxu0 0.0
        %1005 = vmatprep.subr.mxu0 0.0
        %1006 = vmatpush1.msra.mxu0 0.0
        %1007 = vmatprep.subr.mxu0 0.0
        %1008 = vmatpush1.msra.mxu0 0.0
        %1009 = vmatprep.subr.mxu0 0.0
        %1010 = vmatpush1.msra.mxu0 0.0
        %1011 = vmatprep.subr.mxu0 0.0
        %1012 = vmatpush1.msra.mxu0 0.0
        %1013 = vmatprep.subr.mxu0 0.0
        %1014 = vmatpush1.msra.mxu0 0.0
        %1015 = vmatprep.subr.mxu0 0.0
        %1016 = vmatpush1.msra.mxu0 0.0
        %1017 = vmatprep.subr.mxu0 0.0
        %1018 = vmatpush1.msra.mxu0 0.0
        %1019 = vmatprep.subr.mxu0 0.0
        %1020 = vmatpush1.msra.mxu0 0.0
        %1021 = vmatprep.subr.mxu0 0.0
        %1022 = vmatpush1.msra.mxu0 0.0
        %1023 = vmatprep.subr.mxu0 0.0
        %1024 = vmatpush1.msra.mxu0 0.0
        %1025 = vmatprep.subr.mxu0 0.0
        %1026 = vmatpush1.msra.mxu0 0.0
        %1027 = vmatprep.subr.mxu0 0.0
        %1028 = vmatpush1.msra.mxu0 0.0
        %1029 = vmatprep.subr.mxu0 0.0
        %1030 = vmatpush1.msra.mxu0 0.0
        %1031 = vmatprep.subr.mxu0 0.0
        %1032 = vmatpush1.msra.mxu0 0.0
        %1033 = vmatprep.subr.mxu0 0.0
        %1034 = vmatpush1.msra.mxu0 0.0
        %1035 = vmatprep.subr.mxu0 0.0
        %1036 = vmatpush1.msra.mxu0 0.0
        %1037 = vmatprep.subr.mxu0 0.0
        %1038 = vmatpush1.msra.mxu0 0.0
        %1039 = vmatprep.subr.mxu0 0.0
        %1040 = vmatpush1.msra.mxu0 0.0
        %1041 = vmatprep.subr.mxu0 0.0
        %1042 = vmatpush1.msra.mxu0 0.0
        %1043 = vmatprep.subr.mxu0 0.0
        %1044 = vmatpush1.msra.mxu0 0.0
        %1045 = vmatprep.subr.mxu0 0.0
        %1046 = vmatpush1.msra.mxu0 0.0
        %1047 = vmatprep.subr.mxu0 0.0
        %1048 = vmatpush1.msra.mxu0 0.0
        %1049 = vmatprep.subr.mxu0 0.0
        %1050 = vmatpush1.msra.mxu0 0.0
        %1051 = vmatprep.subr.mxu0 0.0
        %1052 = vmatpush1.msra.mxu0 0.0
        %1053 = vmatprep.subr.mxu0 0.0
        %1054 = vmatpush1.msra.mxu0 0.0
        %1055 = vmatprep.mubr.f32.mxu0 0.0
        %v1056 = vand.u32 %v456, 4294901760
        %1057 = vmatmul.mubr.f32.gmra.mrb[0].mxu0 %v1056
        %v1058 = vpop.f32.mrb[0].mxu0
        %v1059 = vadd.f32 %v964, %v1058
        %v1060 = vpop.f32.mrb[0].mxu0
        %v1061 = vadd.f32 %v966, %v1060
        %1062 = vmatprep.mubr.f32.mxu0 0.0
        %v1063 = vand.u32 %v459, 4294901760
        %1064 = vmatmul.mubr.f32.gmra.mrb[0].mxu0 %v1063
        %v1065 = vpop.f32.mrb[0].mxu0
        %v1066 = vadd.f32 %v971, %v1065
        %v1067 = vpop.f32.mrb[0].mxu0
        %v1068 = vadd.f32 %v973, %v1067
        %1069 = vmatprep.mubr.f32.mxu0 0.0
        %v1070 = vand.u32 %v462, 4294901760
        %1071 = vmatmul.mubr.f32.gmra.mrb[0].mxu0 %v1070
        %v1072 = vpop.f32.mrb[0].mxu0
        %v1073 = vadd.f32 %v978, %v1072
        %v1074 = vpop.f32.mrb[0].mxu0
        %v1075 = vadd.f32 %v980, %v1074
        %1076 = vmatprep.mubr.f32.mxu0 0.0
        %v1077 = vand.u32 %v465, 4294901760
        %1078 = vmatmul.mubr.f32.gmra.mrb[0].mxu0 %v1077
        %v1079 = vpop.f32.mrb[0].mxu0
        %v1080 = vadd.f32 %v985, %v1079
        %v1081 = vpop.f32.mrb[0].mxu0
        %v1082 = vadd.f32 %v987, %v1081
        %1083 = vdwg.mxu0
        %v1084 = vmul.f32 %v1059, 0.5
        %v1085 = vmul.f32 %v1061, 0.5
        %v1086 = vmul.f32 %v1066, 0.5
        %v1087 = vmul.f32 %v1068, 0.5
        %v1088 = vmul.f32 %v1073, 0.5
        %v1089 = vmul.f32 %v1075, 0.5
        %v1090 = vmul.f32 %v1080, 0.5
        %v1091 = vmul.f32 %v1082, 0.5
        %v1092 = vmul.f32 %v1059, 0.70710677
        %v1093 = vmul.f32 %v1061, 0.70710677
        %v1094 = vmul.f32 %v1066, 0.70710677
        %v1095 = vmul.f32 %v1068, 0.70710677
        %v1096 = vmul.f32 %v1073, 0.70710677
        %v1097 = vmul.f32 %v1075, 0.70710677
        %v1098 = vmul.f32 %v1080, 0.70710677
        %v1099 = vmul.f32 %v1082, 0.70710677
        %v1100 = vand.u32 2147483647, %v1092
        %v1101 = vand.u32 2147483647, %v1093
        %v1102 = vand.u32 2147483647, %v1094
        %v1103 = vand.u32 2147483647, %v1095
        %v1104 = vand.u32 2147483647, %v1096
        %v1105 = vand.u32 2147483647, %v1097
        %v1106 = vand.u32 2147483647, %v1098
        %v1107 = vand.u32 2147483647, %v1099
        %v1108 = vmul.f32 %v1100, 0.3275911
        %v1109 = vmul.f32 %v1101, 0.3275911
        %v1110 = vmul.f32 %v1102, 0.3275911
        %v1111 = vmul.f32 %v1103, 0.3275911
        %v1112 = vmul.f32 %v1104, 0.3275911
        %v1113 = vmul.f32 %v1105, 0.3275911
        %v1114 = vmul.f32 %v1106, 0.3275911
        %v1115 = vmul.f32 %v1107, 0.3275911
        %v1116 = vadd.f32 %v1108, 1.0
        %v1117 = vadd.f32 %v1109, 1.0
        %v1118 = vadd.f32 %v1110, 1.0
        %v1119 = vadd.f32 %v1111, 1.0
        %v1120 = vadd.f32 %v1112, 1.0
        %v1121 = vadd.f32 %v1113, 1.0
        %v1122 = vadd.f32 %v1114, 1.0
        %v1123 = vadd.f32 %v1115, 1.0
        %v1124 = vrcp.pop %v1116
        %v1125 = vmul.f32 1.0, %v1124
        %v1126 = vrcp.pop %v1117
        %v1127 = vmul.f32 1.0, %v1126
        %v1128 = vrcp.pop %v1118
        %v1129 = vmul.f32 1.0, %v1128
        %v1130 = vrcp.pop %v1119
        %v1131 = vmul.f32 1.0, %v1130
        %v1132 = vrcp.pop %v1120
        %v1133 = vmul.f32 1.0, %v1132
        %v1134 = vrcp.pop %v1121
        %v1135 = vmul.f32 1.0, %v1134
        %v1136 = vrcp.pop %v1122
        %v1137 = vmul.f32 1.0, %v1136
        %v1138 = vrcp.pop %v1123
        %v1139 = vmul.f32 1.0, %v1138
        %v1140 = vmul.f32 %v1125, 1.0614054
        %v1141 = vmul.f32 %v1127, 1.0614054
        %v1142 = vmul.f32 %v1129, 1.0614054
        %v1143 = vmul.f32 %v1131, 1.0614054
        %v1144 = vmul.f32 %v1133, 1.0614054
        %v1145 = vmul.f32 %v1135, 1.0614054
        %v1146 = vmul.f32 %v1137, 1.0614054
        %v1147 = vmul.f32 %v1139, 1.0614054
        %v1148 = vadd.f32 %v1140, -1.4531521
        %v1149 = vadd.f32 %v1141, -1.4531521
        %v1150 = vadd.f32 %v1142, -1.4531521
        %v1151 = vadd.f32 %v1143, -1.4531521
        %v1152 = vadd.f32 %v1144, -1.4531521
        %v1153 = vadd.f32 %v1145, -1.4531521
        %v1154 = vadd.f32 %v1146, -1.4531521
        %v1155 = vadd.f32 %v1147, -1.4531521
        %v1156 = vmul.f32 %v1148, %v1125
        %v1157 = vmul.f32 %v1149, %v1127
        %v1158 = vmul.f32 %v1150, %v1129
        %v1159 = vmul.f32 %v1151, %v1131
        %v1160 = vmul.f32 %v1152, %v1133
        %v1161 = vmul.f32 %v1153, %v1135
        %v1162 = vmul.f32 %v1154, %v1137
        %v1163 = vmul.f32 %v1155, %v1139
        %v1164 = vadd.f32 %v1156, 1.4214138
        %v1165 = vadd.f32 %v1157, 1.4214138
        %v1166 = vadd.f32 %v1158, 1.4214138
        %v1167 = vadd.f32 %v1159, 1.4214138
        %v1168 = vadd.f32 %v1160, 1.4214138
        %v1169 = vadd.f32 %v1161, 1.4214138
        %v1170 = vadd.f32 %v1162, 1.4214138
        %v1171 = vadd.f32 %v1163, 1.4214138
        %v1172 = vmul.f32 %v1164, %v1125
        %v1173 = vmul.f32 %v1165, %v1127
        %v1174 = vmul.f32 %v1166, %v1129
        %v1175 = vmul.f32 %v1167, %v1131
        %v1176 = vmul.f32 %v1168, %v1133
        %v1177 = vmul.f32 %v1169, %v1135
        %v1178 = vmul.f32 %v1170, %v1137
        %v1179 = vmul.f32 %v1171, %v1139
        %v1180 = vadd.f32 %v1172, -0.28449672
        %v1181 = vadd.f32 %v1173, -0.28449672
        %v1182 = vadd.f32 %v1174, -0.28449672
        %v1183 = vadd.f32 %v1175, -0.28449672
        %v1184 = vadd.f32 %v1176, -0.28449672
        %v1185 = vadd.f32 %v1177, -0.28449672
        %v1186 = vadd.f32 %v1178, -0.28449672
        %v1187 = vadd.f32 %v1179, -0.28449672
        %v1188 = vmul.f32 %v1180, %v1125
        %v1189 = vmul.f32 %v1181, %v1127
        %v1190 = vmul.f32 %v1182, %v1129
        %v1191 = vmul.f32 %v1183, %v1131
        %v1192 = vmul.f32 %v1184, %v1133
        %v1193 = vmul.f32 %v1185, %v1135
        %v1194 = vmul.f32 %v1186, %v1137
        %v1195 = vmul.f32 %v1187, %v1139
        %v1196 = vadd.f32 %v1188, 0.2548296
        %v1197 = vadd.f32 %v1189, 0.2548296
        %v1198 = vadd.f32 %v1190, 0.2548296
        %v1199 = vadd.f32 %v1191, 0.2548296
        %v1200 = vadd.f32 %v1192, 0.2548296
        %v1201 = vadd.f32 %v1193, 0.2548296
        %v1202 = vadd.f32 %v1194, 0.2548296
        %v1203 = vadd.f32 %v1195, 0.2548296
        %v1204 = vmul.f32 %v1196, %v1125
        %v1205 = vmul.f32 %v1197, %v1127
        %v1206 = vmul.f32 %v1198, %v1129
        %v1207 = vmul.f32 %v1199, %v1131
        %v1208 = vmul.f32 %v1200, %v1133
        %v1209 = vmul.f32 %v1201, %v1135
        %v1210 = vmul.f32 %v1202, %v1137
        %v1211 = vmul.f32 %v1203, %v1139
        %v1212 = vsub.f32 0.0, %v1100
        %v1213 = vsub.f32 0.0, %v1101
        %v1214 = vsub.f32 0.0, %v1102
        %v1215 = vsub.f32 0.0, %v1103
        %v1216 = vsub.f32 0.0, %v1104
        %v1217 = vsub.f32 0.0, %v1105
        %v1218 = vsub.f32 0.0, %v1106
        %v1219 = vsub.f32 0.0, %v1107
        %v1220 = vmul.f32 %v1212, %v1100
        %v1221 = vmul.f32 %v1213, %v1101
        %v1222 = vmul.f32 %v1214, %v1102
        %v1223 = vmul.f32 %v1215, %v1103
        %v1224 = vmul.f32 %v1216, %v1104
        %v1225 = vmul.f32 %v1217, %v1105
        %v1226 = vmul.f32 %v1218, %v1106
        %v1227 = vmul.f32 %v1219, %v1107
        %v1228 = vmul.f32 %v1220, 1.442695
        %v1229 = vpow.pop %v1228
        %v1230 = vmul.f32 %v1221, 1.442695
        %v1231 = vpow.pop %v1230
        %v1232 = vmul.f32 %v1222, 1.442695
        %v1233 = vpow.pop %v1232
        %v1234 = vmul.f32 %v1223, 1.442695
        %v1235 = vpow.pop %v1234
        %v1236 = vmul.f32 %v1224, 1.442695
        %v1237 = vpow.pop %v1236
        %v1238 = vmul.f32 %v1225, 1.442695
        %v1239 = vpow.pop %v1238
        %v1240 = vmul.f32 %v1226, 1.442695
        %v1241 = vpow.pop %v1240
        %v1242 = vmul.f32 %v1227, 1.442695
        %v1243 = vpow.pop %v1242
        %v1244 = vmul.f32 %v1204, %v1229
        %v1245 = vmul.f32 %v1205, %v1231
        %v1246 = vmul.f32 %v1206, %v1233
        %v1247 = vmul.f32 %v1207, %v1235
        %v1248 = vmul.f32 %v1208, %v1237
        %v1249 = vmul.f32 %v1209, %v1239
        %v1250 = vmul.f32 %v1210, %v1241
        %v1251 = vmul.f32 %v1211, %v1243
        %v1252 = vsub.f32 1.0, %v1244
        %v1253 = vsub.f32 1.0, %v1245
        %v1254 = vsub.f32 1.0, %v1246
        %v1255 = vsub.f32 1.0, %v1247
        %v1256 = vsub.f32 1.0, %v1248
        %v1257 = vsub.f32 1.0, %v1249
        %v1258 = vsub.f32 1.0, %v1250
        %v1259 = vsub.f32 1.0, %v1251
        %vm1260 = vcmp.lt.f32.partialorder %v1092, 0.0
        %vm1261 = vcmp.lt.f32.partialorder %v1093, 0.0
        %vm1262 = vcmp.lt.f32.partialorder %v1094, 0.0
        %vm1263 = vcmp.lt.f32.partialorder %v1095, 0.0
        %vm1264 = vcmp.lt.f32.partialorder %v1096, 0.0
        %vm1265 = vcmp.lt.f32.partialorder %v1097, 0.0
        %vm1266 = vcmp.lt.f32.partialorder %v1098, 0.0
        %vm1267 = vcmp.lt.f32.partialorder %v1099, 0.0
        %v1268 = vsub.f32 0.0, %v1252
        %v1269 = vsub.f32 0.0, %v1253
        %v1270 = vsub.f32 0.0, %v1254
        %v1271 = vsub.f32 0.0, %v1255
        %v1272 = vsub.f32 0.0, %v1256
        %v1273 = vsub.f32 0.0, %v1257
        %v1274 = vsub.f32 0.0, %v1258
        %v1275 = vsub.f32 0.0, %v1259
        %v1276 = vsel %vm1260, %v1268, %v1252
        %v1277 = vsel %vm1261, %v1269, %v1253
        %v1278 = vsel %vm1262, %v1270, %v1254
        %v1279 = vsel %vm1263, %v1271, %v1255
        %v1280 = vsel %vm1264, %v1272, %v1256
        %v1281 = vsel %vm1265, %v1273, %v1257
        %v1282 = vsel %vm1266, %v1274, %v1258
        %v1283 = vsel %vm1267, %v1275, %v1259
        %v1284 = vadd.f32 %v1276, 1.0
        %v1285 = vadd.f32 %v1277, 1.0
        %v1286 = vadd.f32 %v1278, 1.0
        %v1287 = vadd.f32 %v1279, 1.0
        %v1288 = vadd.f32 %v1280, 1.0
        %v1289 = vadd.f32 %v1281, 1.0
        %v1290 = vadd.f32 %v1282, 1.0
        %v1291 = vadd.f32 %v1283, 1.0
        %v1292 = vmul.f32 %v1084, %v1284
        %v1293 = vmul.f32 %v1085, %v1285
        %v1294 = vmul.f32 %v1086, %v1286
        %v1295 = vmul.f32 %v1087, %v1287
        %v1296 = vmul.f32 %v1088, %v1288
        %v1297 = vmul.f32 %v1089, %v1289
        %v1298 = vmul.f32 %v1090, %v1290
        %v1299 = vmul.f32 %v1091, %v1291
        %v1300 = vld [vmem:[%s5] sm:$0xff]
        %v1301 = vld [vmem:[%s6] sm:$0xff]
        %1303 = vset.pattern.permute.xlu0 0
        %1304 = vperm.xlu0 %1303, %v1301
        %v1305 = vpop.permute.xlu0 %1304
        %vm1307 = vcmask 261120
        %v1309 = vsel %vm1307, %v1300, 0
        %v1311 = vand.u32 %v1293, 4294901760
        %1312 = vmatprep.subr.mxu0 %v1311
        %v1313 = vand.u32 %v1292, 4294901760
        %1314 = vmatpush1.msra.mxu0 %v1313
        %v1315 = vand.u32 %v1295, 4294901760
        %1316 = vmatprep.subr.mxu0 %v1315
        %v1317 = vand.u32 %v1294, 4294901760
        %1318 = vmatpush1.msra.mxu0 %v1317
        %v1319 = vand.u32 %v1297, 4294901760
        %1320 = vmatprep.subr.mxu0 %v1319
        %v1321 = vand.u32 %v1296, 4294901760
        %1322 = vmatpush1.msra.mxu0 %v1321
        %v1323 = vand.u32 %v1299, 4294901760
        %1324 = vmatprep.subr.mxu0 %v1323
        %v1325 = vand.u32 %v1298, 4294901760
        %1326 = vmatpush1.msra.mxu0 %v1325
        %1327 = vmatprep.subr.mxu0 0.0
        %1328 = vmatpush1.msra.mxu0 0.0
        %1329 = vmatprep.subr.mxu0 0.0
        %1330 = vmatpush1.msra.mxu0 0.0
        %1331 = vmatprep.subr.mxu0 0.0
        %1332 = vmatpush1.msra.mxu0 0.0
        %1333 = vmatprep.subr.mxu0 0.0
        %1334 = vmatpush1.msra.mxu0 0.0
        %1335 = vmatprep.subr.mxu0 0.0
        %1336 = vmatpush1.msra.mxu0 0.0
        %1337 = vmatprep.subr.mxu0 0.0
        %1338 = vmatpush1.msra.mxu0 0.0
        %1339 = vmatprep.subr.mxu0 0.0
        %1340 = vmatpush1.msra.mxu0 0.0
        %1341 = vmatprep.subr.mxu0 0.0
        %1342 = vmatpush1.msra.mxu0 0.0
        %1343 = vmatprep.subr.mxu0 0.0
        %1344 = vmatpush1.msra.mxu0 0.0
        %1345 = vmatprep.subr.mxu0 0.0
        %1346 = vmatpush1.msra.mxu0 0.0
        %1347 = vmatprep.subr.mxu0 0.0
        %1348 = vmatpush1.msra.mxu0 0.0
        %1349 = vmatprep.subr.mxu0 0.0
        %1350 = vmatpush1.msra.mxu0 0.0
        %1351 = vmatprep.subr.mxu0 0.0
        %1352 = vmatpush1.msra.mxu0 0.0
        %1353 = vmatprep.subr.mxu0 0.0
        %1354 = vmatpush1.msra.mxu0 0.0
        %1355 = vmatprep.subr.mxu0 0.0
        %1356 = vmatpush1.msra.mxu0 0.0
        %1357 = vmatprep.subr.mxu0 0.0
        %1358 = vmatpush1.msra.mxu0 0.0
        %1359 = vmatprep.subr.mxu0 0.0
        %1360 = vmatpush1.msra.mxu0 0.0
        %1361 = vmatprep.subr.mxu0 0.0
        %1362 = vmatpush1.msra.mxu0 0.0
        %1363 = vmatprep.subr.mxu0 0.0
        %1364 = vmatpush1.msra.mxu0 0.0
        %1365 = vmatprep.subr.mxu0 0.0
        %1366 = vmatpush1.msra.mxu0 0.0
        %1367 = vmatprep.subr.mxu0 0.0
        %1368 = vmatpush1.msra.mxu0 0.0
        %1369 = vmatprep.subr.mxu0 0.0
        %1370 = vmatpush1.msra.mxu0 0.0
        %1371 = vmatprep.subr.mxu0 0.0
        %1372 = vmatpush1.msra.mxu0 0.0
        %1373 = vmatprep.subr.mxu0 0.0
        %1374 = vmatpush1.msra.mxu0 0.0
        %1375 = vmatprep.subr.mxu0 0.0
        %1376 = vmatpush1.msra.mxu0 0.0
        %1377 = vmatprep.subr.mxu0 0.0
        %1378 = vmatpush1.msra.mxu0 0.0
        %1379 = vmatprep.subr.mxu0 0.0
        %1380 = vmatpush1.msra.mxu0 0.0
        %1381 = vmatprep.subr.mxu0 0.0
        %1382 = vmatpush1.msra.mxu0 0.0
        %1383 = vmatprep.mubr.f32.mxu0 0.0
        %v1384 = vand.u32 %v1309, 4294901760
        %v1385 = vsub.f32 %v1309, %v1384
        %v1386 = vand.u32 %v1385, 4294901760
        %v1387 = vsub.f32 %v1385, %v1386
        %v1388 = vand.u32 %v1387, 4294901760
        %1389 = vmatmul.mubr.f32.gmra.mrb[0].mxu0 %v1388
        %v1390 = vpop.f32.mrb[0].mxu0
        %v1391 = vadd.f32 %v1305, %v1390
        %v1392 = vpop.f32.mrb[0].mxu0
        %v1393 = vadd.f32 %v1305, %v1392
        %1394 = vdwg.mxu0
        %v1395 = vand.u32 %v1293, 4294901760
        %v1396 = vsub.f32 %v1293, %v1395
        %v1397 = vand.u32 %v1396, 4294901760
        %v1398 = vsub.f32 %v1396, %v1397
        %v1399 = vand.u32 %v1398, 4294901760
        %1400 = vmatprep.subr.mxu0 %v1399
        %v1401 = vand.u32 %v1292, 4294901760
        %v1402 = vsub.f32 %v1292, %v1401
        %v1403 = vand.u32 %v1402, 4294901760
        %v1404 = vsub.f32 %v1402, %v1403
        %v1405 = vand.u32 %v1404, 4294901760
        %1406 = vmatpush1.msra.mxu0 %v1405
        %v1407 = vand.u32 %v1295, 4294901760
        %v1408 = vsub.f32 %v1295, %v1407
        %v1409 = vand.u32 %v1408, 4294901760
        %v1410 = vsub.f32 %v1408, %v1409
        %v1411 = vand.u32 %v1410, 4294901760
        %1412 = vmatprep.subr.mxu0 %v1411
        %v1413 = vand.u32 %v1294, 4294901760
        %v1414 = vsub.f32 %v1294, %v1413
        %v1415 = vand.u32 %v1414, 4294901760
        %v1416 = vsub.f32 %v1414, %v1415
        %v1417 = vand.u32 %v1416, 4294901760
        %1418 = vmatpush1.msra.mxu0 %v1417
        %v1419 = vand.u32 %v1297, 4294901760
        %v1420 = vsub.f32 %v1297, %v1419
        %v1421 = vand.u32 %v1420, 4294901760
        %v1422 = vsub.f32 %v1420, %v1421
        %v1423 = vand.u32 %v1422, 4294901760
        %1424 = vmatprep.subr.mxu0 %v1423
        %v1425 = vand.u32 %v1296, 4294901760
        %v1426 = vsub.f32 %v1296, %v1425
        %v1427 = vand.u32 %v1426, 4294901760
        %v1428 = vsub.f32 %v1426, %v1427
        %v1429 = vand.u32 %v1428, 4294901760
        %1430 = vmatpush1.msra.mxu0 %v1429
        %v1431 = vand.u32 %v1299, 4294901760
        %v1432 = vsub.f32 %v1299, %v1431
        %v1433 = vand.u32 %v1432, 4294901760
        %v1434 = vsub.f32 %v1432, %v1433
        %v1435 = vand.u32 %v1434, 4294901760
        %1436 = vmatprep.subr.mxu0 %v1435
        %v1437 = vand.u32 %v1298, 4294901760
        %v1438 = vsub.f32 %v1298, %v1437
        %v1439 = vand.u32 %v1438, 4294901760
        %v1440 = vsub.f32 %v1438, %v1439
        %v1441 = vand.u32 %v1440, 4294901760
        %1442 = vmatpush1.msra.mxu0 %v1441
        %1443 = vmatprep.subr.mxu0 0.0
        %1444 = vmatpush1.msra.mxu0 0.0
        %1445 = vmatprep.subr.mxu0 0.0
        %1446 = vmatpush1.msra.mxu0 0.0
        %1447 = vmatprep.subr.mxu0 0.0
        %1448 = vmatpush1.msra.mxu0 0.0
        %1449 = vmatprep.subr.mxu0 0.0
        %1450 = vmatpush1.msra.mxu0 0.0
        %1451 = vmatprep.subr.mxu0 0.0
        %1452 = vmatpush1.msra.mxu0 0.0
        %1453 = vmatprep.subr.mxu0 0.0
        %1454 = vmatpush1.msra.mxu0 0.0
        %1455 = vmatprep.subr.mxu0 0.0
        %1456 = vmatpush1.msra.mxu0 0.0
        %1457 = vmatprep.subr.mxu0 0.0
        %1458 = vmatpush1.msra.mxu0 0.0
        %1459 = vmatprep.subr.mxu0 0.0
        %1460 = vmatpush1.msra.mxu0 0.0
        %1461 = vmatprep.subr.mxu0 0.0
        %1462 = vmatpush1.msra.mxu0 0.0
        %1463 = vmatprep.subr.mxu0 0.0
        %1464 = vmatpush1.msra.mxu0 0.0
        %1465 = vmatprep.subr.mxu0 0.0
        %1466 = vmatpush1.msra.mxu0 0.0
        %1467 = vmatprep.subr.mxu0 0.0
        %1468 = vmatpush1.msra.mxu0 0.0
        %1469 = vmatprep.subr.mxu0 0.0
        %1470 = vmatpush1.msra.mxu0 0.0
        %1471 = vmatprep.subr.mxu0 0.0
        %1472 = vmatpush1.msra.mxu0 0.0
        %1473 = vmatprep.subr.mxu0 0.0
        %1474 = vmatpush1.msra.mxu0 0.0
        %1475 = vmatprep.subr.mxu0 0.0
        %1476 = vmatpush1.msra.mxu0 0.0
        %1477 = vmatprep.subr.mxu0 0.0
        %1478 = vmatpush1.msra.mxu0 0.0
        %1479 = vmatprep.subr.mxu0 0.0
        %1480 = vmatpush1.msra.mxu0 0.0
        %1481 = vmatprep.subr.mxu0 0.0
        %1482 = vmatpush1.msra.mxu0 0.0
        %1483 = vmatprep.subr.mxu0 0.0
        %1484 = vmatpush1.msra.mxu0 0.0
        %1485 = vmatprep.subr.mxu0 0.0
        %1486 = vmatpush1.msra.mxu0 0.0
        %1487 = vmatprep.subr.mxu0 0.0
        %1488 = vmatpush1.msra.mxu0 0.0
        %1489 = vmatprep.subr.mxu0 0.0
        %1490 = vmatpush1.msra.mxu0 0.0
        %1491 = vmatprep.subr.mxu0 0.0
        %1492 = vmatpush1.msra.mxu0 0.0
        %1493 = vmatprep.subr.mxu0 0.0
        %1494 = vmatpush1.msra.mxu0 0.0
        %1495 = vmatprep.subr.mxu0 0.0
        %1496 = vmatpush1.msra.mxu0 0.0
        %1497 = vmatprep.subr.mxu0 0.0
        %1498 = vmatpush1.msra.mxu0 0.0
        %1499 = vmatprep.mubr.f32.mxu0 0.0
        %v1500 = vand.u32 %v1309, 4294901760
        %1501 = vmatmul.mubr.f32.gmra.mrb[0].mxu0 %v1500
        %v1502 = vpop.f32.mrb[0].mxu0
        %v1503 = vadd.f32 %v1391, %v1502
        %v1504 = vpop.f32.mrb[0].mxu0
        %v1505 = vadd.f32 %v1393, %v1504
        %1506 = vdwg.mxu0
        %v1507 = vand.u32 %v1293, 4294901760
        %v1508 = vsub.f32 %v1293, %v1507
        %1509 = vmatprep.subr.mxu0 %v1508
        %v1510 = vand.u32 %v1292, 4294901760
        %v1511 = vsub.f32 %v1292, %v1510
        %1512 = vmatpush1.msra.mxu0 %v1511
        %v1513 = vand.u32 %v1295, 4294901760
        %v1514 = vsub.f32 %v1295, %v1513
        %1515 = vmatprep.subr.mxu0 %v1514
        %v1516 = vand.u32 %v1294, 4294901760
        %v1517 = vsub.f32 %v1294, %v1516
        %1518 = vmatpush1.msra.mxu0 %v1517
        %v1519 = vand.u32 %v1297, 4294901760
        %v1520 = vsub.f32 %v1297, %v1519
        %1521 = vmatprep.subr.mxu0 %v1520
        %v1522 = vand.u32 %v1296, 4294901760
        %v1523 = vsub.f32 %v1296, %v1522
        %1524 = vmatpush1.msra.mxu0 %v1523
        %v1525 = vand.u32 %v1299, 4294901760
        %v1526 = vsub.f32 %v1299, %v1525
        %1527 = vmatprep.subr.mxu0 %v1526
        %v1528 = vand.u32 %v1298, 4294901760
        %v1529 = vsub.f32 %v1298, %v1528
        %1530 = vmatpush1.msra.mxu0 %v1529
        %1531 = vmatprep.subr.mxu0 0.0
        %1532 = vmatpush1.msra.mxu0 0.0
        %1533 = vmatprep.subr.mxu0 0.0
        %1534 = vmatpush1.msra.mxu0 0.0
        %1535 = vmatprep.subr.mxu0 0.0
        %1536 = vmatpush1.msra.mxu0 0.0
        %1537 = vmatprep.subr.mxu0 0.0
        %1538 = vmatpush1.msra.mxu0 0.0
        %1539 = vmatprep.subr.mxu0 0.0
        %1540 = vmatpush1.msra.mxu0 0.0
        %1541 = vmatprep.subr.mxu0 0.0
        %1542 = vmatpush1.msra.mxu0 0.0
        %1543 = vmatprep.subr.mxu0 0.0
        %1544 = vmatpush1.msra.mxu0 0.0
        %1545 = vmatprep.subr.mxu0 0.0
        %1546 = vmatpush1.msra.mxu0 0.0
        %1547 = vmatprep.subr.mxu0 0.0
        %1548 = vmatpush1.msra.mxu0 0.0
        %1549 = vmatprep.subr.mxu0 0.0
        %1550 = vmatpush1.msra.mxu0 0.0
        %1551 = vmatprep.subr.mxu0 0.0
        %1552 = vmatpush1.msra.mxu0 0.0
        %1553 = vmatprep.subr.mxu0 0.0
        %1554 = vmatpush1.msra.mxu0 0.0
        %1555 = vmatprep.subr.mxu0 0.0
        %1556 = vmatpush1.msra.mxu0 0.0
        %1557 = vmatprep.subr.mxu0 0.0
        %1558 = vmatpush1.msra.mxu0 0.0
        %1559 = vmatprep.subr.mxu0 0.0
        %1560 = vmatpush1.msra.mxu0 0.0
        %1561 = vmatprep.subr.mxu0 0.0
        %1562 = vmatpush1.msra.mxu0 0.0
        %1563 = vmatprep.subr.mxu0 0.0
        %1564 = vmatpush1.msra.mxu0 0.0
        %1565 = vmatprep.subr.mxu0 0.0
        %1566 = vmatpush1.msra.mxu0 0.0
        %1567 = vmatprep.subr.mxu0 0.0
        %1568 = vmatpush1.msra.mxu0 0.0
        %1569 = vmatprep.subr.mxu0 0.0
        %1570 = vmatpush1.msra.mxu0 0.0
        %1571 = vmatprep.subr.mxu0 0.0
        %1572 = vmatpush1.msra.mxu0 0.0
        %1573 = vmatprep.subr.mxu0 0.0
        %1574 = vmatpush1.msra.mxu0 0.0
        %1575 = vmatprep.subr.mxu0 0.0
        %1576 = vmatpush1.msra.mxu0 0.0
        %1577 = vmatprep.subr.mxu0 0.0
        %1578 = vmatpush1.msra.mxu0 0.0
        %1579 = vmatprep.subr.mxu0 0.0
        %1580 = vmatpush1.msra.mxu0 0.0
        %1581 = vmatprep.subr.mxu0 0.0
        %1582 = vmatpush1.msra.mxu0 0.0
        %1583 = vmatprep.subr.mxu0 0.0
        %1584 = vmatpush1.msra.mxu0 0.0
        %1585 = vmatprep.subr.mxu0 0.0
        %1586 = vmatpush1.msra.mxu0 0.0
        %1587 = vmatprep.mubr.f32.mxu0 0.0
        %v1588 = vand.u32 %v1309, 4294901760
        %v1589 = vsub.f32 %v1309, %v1588
        %1590 = vmatmul.mubr.f32.gmra.mrb[0].mxu0 %v1589
        %v1591 = vpop.f32.mrb[0].mxu0
        %v1592 = vadd.f32 %v1503, %v1591
        %v1593 = vpop.f32.mrb[0].mxu0
        %v1594 = vadd.f32 %v1505, %v1593
        %1595 = vdwg.mxu0
        %v1596 = vand.u32 %v1293, 4294901760
        %1597 = vmatprep.subr.mxu0 %v1596
        %v1598 = vand.u32 %v1292, 4294901760
        %1599 = vmatpush1.msra.mxu0 %v1598
        %v1600 = vand.u32 %v1295, 4294901760
        %1601 = vmatprep.subr.mxu0 %v1600
        %v1602 = vand.u32 %v1294, 4294901760
        %1603 = vmatpush1.msra.mxu0 %v1602
        %v1604 = vand.u32 %v1297, 4294901760
        %1605 = vmatprep.subr.mxu0 %v1604
        %v1606 = vand.u32 %v1296, 4294901760
        %1607 = vmatpush1.msra.mxu0 %v1606
        %v1608 = vand.u32 %v1299, 4294901760
        %1609 = vmatprep.subr.mxu0 %v1608
        %v1610 = vand.u32 %v1298, 4294901760
        %1611 = vmatpush1.msra.mxu0 %v1610
        %1612 = vmatprep.subr.mxu0 0.0
        %1613 = vmatpush1.msra.mxu0 0.0
        %1614 = vmatprep.subr.mxu0 0.0
        %1615 = vmatpush1.msra.mxu0 0.0
        %1616 = vmatprep.subr.mxu0 0.0
        %1617 = vmatpush1.msra.mxu0 0.0
        %1618 = vmatprep.subr.mxu0 0.0
        %1619 = vmatpush1.msra.mxu0 0.0
        %1620 = vmatprep.subr.mxu0 0.0
        %1621 = vmatpush1.msra.mxu0 0.0
        %1622 = vmatprep.subr.mxu0 0.0
        %1623 = vmatpush1.msra.mxu0 0.0
        %1624 = vmatprep.subr.mxu0 0.0
        %1625 = vmatpush1.msra.mxu0 0.0
        %1626 = vmatprep.subr.mxu0 0.0
        %1627 = vmatpush1.msra.mxu0 0.0
        %1628 = vmatprep.subr.mxu0 0.0
        %1629 = vmatpush1.msra.mxu0 0.0
        %1630 = vmatprep.subr.mxu0 0.0
        %1631 = vmatpush1.msra.mxu0 0.0
        %1632 = vmatprep.subr.mxu0 0.0
        %1633 = vmatpush1.msra.mxu0 0.0
        %1634 = vmatprep.subr.mxu0 0.0
        %1635 = vmatpush1.msra.mxu0 0.0
        %1636 = vmatprep.subr.mxu0 0.0
        %1637 = vmatpush1.msra.mxu0 0.0
        %1638 = vmatprep.subr.mxu0 0.0
        %1639 = vmatpush1.msra.mxu0 0.0
        %1640 = vmatprep.subr.mxu0 0.0
        %1641 = vmatpush1.msra.mxu0 0.0
        %1642 = vmatprep.subr.mxu0 0.0
        %1643 = vmatpush1.msra.mxu0 0.0
        %1644 = vmatprep.subr.mxu0 0.0
        %1645 = vmatpush1.msra.mxu0 0.0
        %1646 = vmatprep.subr.mxu0 0.0
        %1647 = vmatpush1.msra.mxu0 0.0
        %1648 = vmatprep.subr.mxu0 0.0
        %1649 = vmatpush1.msra.mxu0 0.0
        %1650 = vmatprep.subr.mxu0 0.0
        %1651 = vmatpush1.msra.mxu0 0.0
        %1652 = vmatprep.subr.mxu0 0.0
        %1653 = vmatpush1.msra.mxu0 0.0
        %1654 = vmatprep.subr.mxu0 0.0
        %1655 = vmatpush1.msra.mxu0 0.0
        %1656 = vmatprep.subr.mxu0 0.0
        %1657 = vmatpush1.msra.mxu0 0.0
        %1658 = vmatprep.subr.mxu0 0.0
        %1659 = vmatpush1.msra.mxu0 0.0
        %1660 = vmatprep.subr.mxu0 0.0
        %1661 = vmatpush1.msra.mxu0 0.0
        %1662 = vmatprep.subr.mxu0 0.0
        %1663 = vmatpush1.msra.mxu0 0.0
        %1664 = vmatprep.subr.mxu0 0.0
        %1665 = vmatpush1.msra.mxu0 0.0
        %1666 = vmatprep.subr.mxu0 0.0
        %1667 = vmatpush1.msra.mxu0 0.0
        %1668 = vmatprep.mubr.f32.mxu0 0.0
        %v1669 = vand.u32 %v1309, 4294901760
        %v1670 = vsub.f32 %v1309, %v1669
        %v1671 = vand.u32 %v1670, 4294901760
        %1672 = vmatmul.mubr.f32.gmra.mrb[0].mxu0 %v1671
        %v1673 = vpop.f32.mrb[0].mxu0
        %v1674 = vadd.f32 %v1592, %v1673
        %v1675 = vpop.f32.mrb[0].mxu0
        %v1676 = vadd.f32 %v1594, %v1675
        %1677 = vdwg.mxu0
        %v1678 = vand.u32 %v1293, 4294901760
        %v1679 = vsub.f32 %v1293, %v1678
        %v1680 = vand.u32 %v1679, 4294901760
        %1681 = vmatprep.subr.mxu0 %v1680
        %v1682 = vand.u32 %v1292, 4294901760
        %v1683 = vsub.f32 %v1292, %v1682
        %v1684 = vand.u32 %v1683, 4294901760
        %1685 = vmatpush1.msra.mxu0 %v1684
        %v1686 = vand.u32 %v1295, 4294901760
        %v1687 = vsub.f32 %v1295, %v1686
        %v1688 = vand.u32 %v1687, 4294901760
        %1689 = vmatprep.subr.mxu0 %v1688
        %v1690 = vand.u32 %v1294, 4294901760
        %v1691 = vsub.f32 %v1294, %v1690
        %v1692 = vand.u32 %v1691, 4294901760
        %1693 = vmatpush1.msra.mxu0 %v1692
        %v1694 = vand.u32 %v1297, 4294901760
        %v1695 = vsub.f32 %v1297, %v1694
        %v1696 = vand.u32 %v1695, 4294901760
        %1697 = vmatprep.subr.mxu0 %v1696
        %v1698 = vand.u32 %v1296, 4294901760
        %v1699 = vsub.f32 %v1296, %v1698
        %v1700 = vand.u32 %v1699, 4294901760
        %1701 = vmatpush1.msra.mxu0 %v1700
        %v1702 = vand.u32 %v1299, 4294901760
        %v1703 = vsub.f32 %v1299, %v1702
        %v1704 = vand.u32 %v1703, 4294901760
        %1705 = vmatprep.subr.mxu0 %v1704
        %v1706 = vand.u32 %v1298, 4294901760
        %v1707 = vsub.f32 %v1298, %v1706
        %v1708 = vand.u32 %v1707, 4294901760
        %1709 = vmatpush1.msra.mxu0 %v1708
        %1710 = vmatprep.subr.mxu0 0.0
        %1711 = vmatpush1.msra.mxu0 0.0
        %1712 = vmatprep.subr.mxu0 0.0
        %1713 = vmatpush1.msra.mxu0 0.0
        %1714 = vmatprep.subr.mxu0 0.0
        %1715 = vmatpush1.msra.mxu0 0.0
        %1716 = vmatprep.subr.mxu0 0.0
        %1717 = vmatpush1.msra.mxu0 0.0
        %1718 = vmatprep.subr.mxu0 0.0
        %1719 = vmatpush1.msra.mxu0 0.0
        %1720 = vmatprep.subr.mxu0 0.0
        %1721 = vmatpush1.msra.mxu0 0.0
        %1722 = vmatprep.subr.mxu0 0.0
        %1723 = vmatpush1.msra.mxu0 0.0
        %1724 = vmatprep.subr.mxu0 0.0
        %1725 = vmatpush1.msra.mxu0 0.0
        %1726 = vmatprep.subr.mxu0 0.0
        %1727 = vmatpush1.msra.mxu0 0.0
        %1728 = vmatprep.subr.mxu0 0.0
        %1729 = vmatpush1.msra.mxu0 0.0
        %1730 = vmatprep.subr.mxu0 0.0
        %1731 = vmatpush1.msra.mxu0 0.0
        %1732 = vmatprep.subr.mxu0 0.0
        %1733 = vmatpush1.msra.mxu0 0.0
        %1734 = vmatprep.subr.mxu0 0.0
        %1735 = vmatpush1.msra.mxu0 0.0
        %1736 = vmatprep.subr.mxu0 0.0
        %1737 = vmatpush1.msra.mxu0 0.0
        %1738 = vmatprep.subr.mxu0 0.0
        %1739 = vmatpush1.msra.mxu0 0.0
        %1740 = vmatprep.subr.mxu0 0.0
        %1741 = vmatpush1.msra.mxu0 0.0
        %1742 = vmatprep.subr.mxu0 0.0
        %1743 = vmatpush1.msra.mxu0 0.0
        %1744 = vmatprep.subr.mxu0 0.0
        %1745 = vmatpush1.msra.mxu0 0.0
        %1746 = vmatprep.subr.mxu0 0.0
        %1747 = vmatpush1.msra.mxu0 0.0
        %1748 = vmatprep.subr.mxu0 0.0
        %1749 = vmatpush1.msra.mxu0 0.0
        %1750 = vmatprep.subr.mxu0 0.0
        %1751 = vmatpush1.msra.mxu0 0.0
        %1752 = vmatprep.subr.mxu0 0.0
        %1753 = vmatpush1.msra.mxu0 0.0
        %1754 = vmatprep.subr.mxu0 0.0
        %1755 = vmatpush1.msra.mxu0 0.0
        %1756 = vmatprep.subr.mxu0 0.0
        %1757 = vmatpush1.msra.mxu0 0.0
        %1758 = vmatprep.subr.mxu0 0.0
        %1759 = vmatpush1.msra.mxu0 0.0
        %1760 = vmatprep.subr.mxu0 0.0
        %1761 = vmatpush1.msra.mxu0 0.0
        %1762 = vmatprep.subr.mxu0 0.0
        %1763 = vmatpush1.msra.mxu0 0.0
        %1764 = vmatprep.subr.mxu0 0.0
        %1765 = vmatpush1.msra.mxu0 0.0
        %1766 = vmatprep.mubr.f32.mxu0 0.0
        %v1767 = vand.u32 %v1309, 4294901760
        %1768 = vmatmul.mubr.f32.gmra.mrb[0].mxu0 %v1767
        %v1769 = vpop.f32.mrb[0].mxu0
        %v1770 = vadd.f32 %v1674, %v1769
        %v1771 = vpop.f32.mrb[0].mxu0
        %v1772 = vadd.f32 %v1676, %v1771
        %1773 = vdwg.mxu0
        %v1774 = vand.u32 %v1293, 4294901760
        %1775 = vmatprep.subr.mxu0 %v1774
        %v1776 = vand.u32 %v1292, 4294901760
        %1777 = vmatpush1.msra.mxu0 %v1776
        %v1778 = vand.u32 %v1295, 4294901760
        %1779 = vmatprep.subr.mxu0 %v1778
        %v1780 = vand.u32 %v1294, 4294901760
        %1781 = vmatpush1.msra.mxu0 %v1780
        %v1782 = vand.u32 %v1297, 4294901760
        %1783 = vmatprep.subr.mxu0 %v1782
        %v1784 = vand.u32 %v1296, 4294901760
        %1785 = vmatpush1.msra.mxu0 %v1784
        %v1786 = vand.u32 %v1299, 4294901760
        %1787 = vmatprep.subr.mxu0 %v1786
        %v1788 = vand.u32 %v1298, 4294901760
        %1789 = vmatpush1.msra.mxu0 %v1788
        %1790 = vmatprep.subr.mxu0 0.0
        %1791 = vmatpush1.msra.mxu0 0.0
        %1792 = vmatprep.subr.mxu0 0.0
        %1793 = vmatpush1.msra.mxu0 0.0
        %1794 = vmatprep.subr.mxu0 0.0
        %1795 = vmatpush1.msra.mxu0 0.0
        %1796 = vmatprep.subr.mxu0 0.0
        %1797 = vmatpush1.msra.mxu0 0.0
        %1798 = vmatprep.subr.mxu0 0.0
        %1799 = vmatpush1.msra.mxu0 0.0
        %1800 = vmatprep.subr.mxu0 0.0
        %1801 = vmatpush1.msra.mxu0 0.0
        %1802 = vmatprep.subr.mxu0 0.0
        %1803 = vmatpush1.msra.mxu0 0.0
        %1804 = vmatprep.subr.mxu0 0.0
        %1805 = vmatpush1.msra.mxu0 0.0
        %1806 = vmatprep.subr.mxu0 0.0
        %1807 = vmatpush1.msra.mxu0 0.0
        %1808 = vmatprep.subr.mxu0 0.0
        %1809 = vmatpush1.msra.mxu0 0.0
        %1810 = vmatprep.subr.mxu0 0.0
        %1811 = vmatpush1.msra.mxu0 0.0
        %1812 = vmatprep.subr.mxu0 0.0
        %1813 = vmatpush1.msra.mxu0 0.0
        %1814 = vmatprep.subr.mxu0 0.0
        %1815 = vmatpush1.msra.mxu0 0.0
        %1816 = vmatprep.subr.mxu0 0.0
        %1817 = vmatpush1.msra.mxu0 0.0
        %1818 = vmatprep.subr.mxu0 0.0
        %1819 = vmatpush1.msra.mxu0 0.0
        %1820 = vmatprep.subr.mxu0 0.0
        %1821 = vmatpush1.msra.mxu0 0.0
        %1822 = vmatprep.subr.mxu0 0.0
        %1823 = vmatpush1.msra.mxu0 0.0
        %1824 = vmatprep.subr.mxu0 0.0
        %1825 = vmatpush1.msra.mxu0 0.0
        %1826 = vmatprep.subr.mxu0 0.0
        %1827 = vmatpush1.msra.mxu0 0.0
        %1828 = vmatprep.subr.mxu0 0.0
        %1829 = vmatpush1.msra.mxu0 0.0
        %1830 = vmatprep.subr.mxu0 0.0
        %1831 = vmatpush1.msra.mxu0 0.0
        %1832 = vmatprep.subr.mxu0 0.0
        %1833 = vmatpush1.msra.mxu0 0.0
        %1834 = vmatprep.subr.mxu0 0.0
        %1835 = vmatpush1.msra.mxu0 0.0
        %1836 = vmatprep.subr.mxu0 0.0
        %1837 = vmatpush1.msra.mxu0 0.0
        %1838 = vmatprep.subr.mxu0 0.0
        %1839 = vmatpush1.msra.mxu0 0.0
        %1840 = vmatprep.subr.mxu0 0.0
        %1841 = vmatpush1.msra.mxu0 0.0
        %1842 = vmatprep.subr.mxu0 0.0
        %1843 = vmatpush1.msra.mxu0 0.0
        %1844 = vmatprep.subr.mxu0 0.0
        %1845 = vmatpush1.msra.mxu0 0.0
        %1846 = vmatprep.mubr.f32.mxu0 0.0
        %v1847 = vand.u32 %v1309, 4294901760
        %1848 = vmatmul.mubr.f32.gmra.mrb[0].mxu0 %v1847
        %v1849 = vpop.f32.mrb[0].mxu0
        %v1850 = vadd.f32 %v1770, %v1849
        %v1851 = vpop.f32.mrb[0].mxu0
        %v1852 = vadd.f32 %v1772, %v1851
        %1853 = vdwg.mxu0
        %v1854 = vmax.f32 %v1850, 0.0
        %v1855 = vmax.f32 %v1852, 0.0
        %v1856 = vadd.f32 %v1854, 0.001
        %v1857 = vadd.f32 %v1855, 0.001
        %v1858 = vld [vmem:[%s417] sm:$0xff]
        %v1860 = vcombine.high %v1858, %v1858
        %v1862 = vsel %vm467, %v1858, 0.0
        %v1863 = vrot.slane %v1862, 4
        %v1864 = vadd.f32 %v1862, %v1863
        %v1865 = vrot.slane %v1864, 2
        %v1866 = vadd.f32 %v1864, %v1865
        %v1867 = vrot.slane %v1866, 1
        %v1868 = vadd.f32 %v1866, %v1867
        %v1869 = vsel %vm467, %v1860, 0.0
        %v1870 = vrot.slane %v1869, 4
        %v1871 = vadd.f32 %v1869, %v1870
        %v1872 = vrot.slane %v1871, 2
        %v1873 = vadd.f32 %v1871, %v1872
        %v1874 = vrot.slane %v1873, 1
        %v1875 = vadd.f32 %v1873, %v1874
        %v1878 = vcombine.low %v1868, %v1875
        %v1880 = vrcp.pop %v1878
        %v1881 = vmul.f32 %v1858, %v1880
        %vm1882 = vcmask 1041408
        %v1883 = vsel %vm1882, %v1856, 0.0
        %v1884 = vrot.slane %v1883, 4
        %v1885 = vadd.f32 %v1883, %v1884
        %v1886 = vrot.slane %v1885, 2
        %v1887 = vadd.f32 %v1885, %v1886
        %v1888 = vrot.slane %v1887, 1
        %v1889 = vadd.f32 %v1887, %v1888
        %v1890 = vsel %vm1882, %v1857, 0.0
        %v1891 = vrot.slane %v1890, 4
        %v1892 = vadd.f32 %v1890, %v1891
        %v1893 = vrot.slane %v1892, 2
        %v1894 = vadd.f32 %v1892, %v1893
        %v1895 = vrot.slane %v1894, 1
        %v1896 = vadd.f32 %v1894, %v1895
        %v1899 = vcombine.low %v1889, %v1896
        %v1901 = vrcp.pop %v1899
        %v1902 = vmul.f32 %v1881, %v1901
        %v1904 = vlaneseq
        %v1905 = vshrl.u32 %v1904, 7
        %v1906 = vsub.s32 0, %v1905
        %v1907 = vrot.slane %v1902, %v1906
        %v1908 = vlaneseq
        %v1909 = vshrl.u32 %v1908, 7
        %v1910 = vsub.s32 4, %v1909
        %v1911 = vrot.slane %v1902, %v1910
        %v1914 = vlaneseq
        %v1915 = vshrl.u32 %v1914, 7
        %v1916 = vsub.s32 0, %v1915
        %v1917 = vrot.slane %v1907, %v1916
        %v1918 = vlaneseq
        %v1919 = vshrl.u32 %v1918, 7
        %v1920 = vsub.s32 0, %v1919
        %v1921 = vrot.slane %v1911, %v1920
        %v1922 = vmul.f32 %v1856, %v1917
        %v1923 = vmul.f32 %v1857, %v1921
        %v1926 = vrot.slane %v1856, 2
        %v1927 = vrot.slane %v1857, 2
        %v1930 = vsel %vm1882, %v1926, 0.0
        %v1931 = vrot.slane %v1930, 4
        %v1932 = vadd.f32 %v1930, %v1931
        %v1933 = vrot.slane %v1932, 2
        %v1934 = vadd.f32 %v1932, %v1933
        %v1935 = vrot.slane %v1934, 1
        %v1936 = vadd.f32 %v1934, %v1935
        %v1937 = vsel %vm1882, %v1927, 0.0
        %v1938 = vrot.slane %v1937, 4
        %v1939 = vadd.f32 %v1937, %v1938
        %v1940 = vrot.slane %v1939, 2
        %v1941 = vadd.f32 %v1939, %v1940
        %v1942 = vrot.slane %v1941, 1
        %v1943 = vadd.f32 %v1941, %v1942
        %v1946 = vcombine.low %v1936, %v1943
        %v1947 = vrot.slane %v1946, 7
        %v1949 = vrcp.pop %v1947
        %v1950 = vmul.f32 %v1881, %v1949
        %v1952 = vlaneseq
        %v1953 = vshrl.u32 %v1952, 7
        %v1954 = vsub.s32 1, %v1953
        %v1955 = vrot.slane %v1950, %v1954
        %v1956 = vlaneseq
        %v1957 = vshrl.u32 %v1956, 7
        %v1958 = vsub.s32 5, %v1957
        %v1959 = vrot.slane %v1950, %v1958
        %v1962 = vlaneseq
        %v1963 = vshrl.u32 %v1962, 7
        %v1964 = vsub.s32 1, %v1963
        %v1965 = vrot.slane %v1955, %v1964
        %v1966 = vlaneseq
        %v1967 = vshrl.u32 %v1966, 7
        %v1968 = vsub.s32 1, %v1967
        %v1969 = vrot.slane %v1959, %v1968
        %v1970 = vmul.f32 %v1856, %v1965
        %v1971 = vmul.f32 %v1857, %v1969
        %v1972 = vrot.slane %v1856, 4
        %v1973 = vrot.slane %v1857, 4
        %v1976 = vsel %vm1882, %v1972, 0.0
        %v1977 = vrot.slane %v1976, 4
        %v1978 = vadd.f32 %v1976, %v1977
        %v1979 = vrot.slane %v1978, 2
        %v1980 = vadd.f32 %v1978, %v1979
        %v1981 = vrot.slane %v1980, 1
        %v1982 = vadd.f32 %v1980, %v1981
        %v1983 = vsel %vm1882, %v1973, 0.0
        %v1984 = vrot.slane %v1983, 4
        %v1985 = vadd.f32 %v1983, %v1984
        %v1986 = vrot.slane %v1985, 2
        %v1987 = vadd.f32 %v1985, %v1986
        %v1988 = vrot.slane %v1987, 1
        %v1989 = vadd.f32 %v1987, %v1988
        %v1992 = vcombine.low %v1982, %v1989
        %v1993 = vrot.slane %v1992, 6
        %v1995 = vrcp.pop %v1993
        %v1996 = vmul.f32 %v1881, %v1995
        %v1998 = vlaneseq
        %v1999 = vshrl.u32 %v1998, 7
        %v2000 = vsub.s32 2, %v1999
        %v2001 = vrot.slane %v1996, %v2000
        %v2002 = vlaneseq
        %v2003 = vshrl.u32 %v2002, 7
        %v2004 = vsub.s32 6, %v2003
        %v2005 = vrot.slane %v1996, %v2004
        %v2008 = vlaneseq
        %v2009 = vshrl.u32 %v2008, 7
        %v2010 = vsub.s32 2, %v2009
        %v2011 = vrot.slane %v2001, %v2010
        %v2012 = vlaneseq
        %v2013 = vshrl.u32 %v2012, 7
        %v2014 = vsub.s32 2, %v2013
        %v2015 = vrot.slane %v2005, %v2014
        %v2016 = vmul.f32 %v1856, %v2011
        %v2017 = vmul.f32 %v1857, %v2015
        %v2018 = vrot.slane %v1856, 6
        %v2019 = vrot.slane %v1857, 6
        %v2022 = vsel %vm1882, %v2018, 0.0
        %v2023 = vrot.slane %v2022, 4
        %v2024 = vadd.f32 %v2022, %v2023
        %v2025 = vrot.slane %v2024, 2
        %v2026 = vadd.f32 %v2024, %v2025
        %v2027 = vrot.slane %v2026, 1
        %v2028 = vadd.f32 %v2026, %v2027
        %v2029 = vsel %vm1882, %v2019, 0.0
        %v2030 = vrot.slane %v2029, 4
        %v2031 = vadd.f32 %v2029, %v2030
        %v2032 = vrot.slane %v2031, 2
        %v2033 = vadd.f32 %v2031, %v2032
        %v2034 = vrot.slane %v2033, 1
        %v2035 = vadd.f32 %v2033, %v2034
        %v2038 = vcombine.low %v2028, %v2035
        %v2039 = vrot.slane %v2038, 5
        %v2041 = vrcp.pop %v2039
        %v2042 = vmul.f32 %v1881, %v2041
        %v2044 = vlaneseq
        %v2045 = vshrl.u32 %v2044, 7
        %v2046 = vsub.s32 3, %v2045
        %v2047 = vrot.slane %v2042, %v2046
        %v2048 = vlaneseq
        %v2049 = vshrl.u32 %v2048, 7
        %v2050 = vsub.s32 7, %v2049
        %v2051 = vrot.slane %v2042, %v2050
        %v2054 = vlaneseq
        %v2055 = vshrl.u32 %v2054, 7
        %v2056 = vsub.s32 3, %v2055
        %v2057 = vrot.slane %v2047, %v2056
        %v2058 = vlaneseq
        %v2059 = vshrl.u32 %v2058, 7
        %v2060 = vsub.s32 3, %v2059
        %v2061 = vrot.slane %v2051, %v2060
        %v2062 = vmul.f32 %v1856, %v2057
        %v2063 = vmul.f32 %v1857, %v2061
        %v2064 = vsel %vm1882, %v1922, %v1970
        %v2065 = vsel %vm1882, %v1923, %v1971
        %v2066 = vsel %vm467, %v2064, %v2016
        %v2067 = vsel %vm467, %v2065, %v2017
        %vm2068 = vcmask 1045504
        %v2069 = vsel %vm2068, %v2066, %v2062
        %v2070 = vsel %vm2068, %v2067, %v2063
        %v2073 = vrot.slane %v2069, 7
        %v2074 = vrot.slane %v2070, 7
        %vm2077 = vcmask 1040384
        %v2078 = vsel %vm2077, 0.0, %v2073
        %v2079 = vsel %vm2077, 0.0, %v2074
        %v2080 = vadd.f32 %v2069, %v2078
        %v2081 = vadd.f32 %v2070, %v2079
        %v2084 = vrot.slane %v2080, 6
        %v2085 = vrot.slane %v2081, 6
        %v2088 = vsel %vm1882, 0.0, %v2084
        %v2089 = vsel %vm1882, 0.0, %v2085
        %v2090 = vadd.f32 %v2080, %v2088
        %v2091 = vadd.f32 %v2081, %v2089
        %v2094 = vrot.slane %v2090, 4
        %v2095 = vrot.slane %v2091, 4
        %v2098 = vsel %vm467, 0.0, %v2094
        %v2099 = vsel %vm467, 0.0, %v2095
        %v2100 = vadd.f32 %v2090, %v2098
        %v2101 = vadd.f32 %v2091, %v2099
        %v2102 = vmul.f32 %v2069, 0.5
        %v2103 = vmul.f32 %v2070, 0.5
        %v2104 = vsub.f32 %v2100, %v2102
        %v2105 = vsub.f32 %v2101, %v2103
        %v2106 = vmul.f32 %v2104, 9.999
        %v2107 = vmul.f32 %v2105, 9.999
        %v2108 = vadd.f32 %v2106, 0.001
        %v2109 = vadd.f32 %v2107, 0.001
        %2110 = vst [vmem:[%s381] sm:$0xff] %v2069
        %2111 = vst [vmem:[%s381 + $0x8] sm:$0xff] %v2070
        %2112 = vst [vmem:[%s388] sm:$0xff] %v2108
        %2113 = vst [vmem:[%s388 + $0x8] sm:$0xff] %v2109
        %s2114 = sand.u32 %s216, 1
        %s2115 = scalar_lea.sflag [#allocation3], %s2114
        %s2116 = sand.u32 %s216, 1
        %s2117 = smul.addr %s2116, 16
        %s2118 = scalar_lea.vmem [#allocation2], %s2117
        %s2119 = sand.u32 %s244, 1
        %s2120 = scalar_lea.sflag [#allocation5], %s2119
        %s2121 = sand.u32 %s244, 1
        %s2122 = smul.addr %s2121, 16
        %s2123 = scalar_lea.vmem [#allocation4], %s2122
        // Predicated region
        $region49: #{tpu_custom_call.1} parent=47 // pred_check
          %p2124 = pneg %p226
        $region50: #{tpu_custom_call.1} parent=47 // pred_check_branch
          %2126 = sbr.rel (%p2124) target = $region52
        $region51: #{tpu_custom_call.1} parent=47 // pred_region
          %s2127 = smul.u32 2, %s31
          %s2129 = ssub.s32 256, 256
          %2130 = vsyncadd %s2115, %s2129
          %s2131 = smul.addr %s30, 2
          %s2132 = sadd.s32 %s2127, %s2131
          %s2133 = smul.addr %s2132, 128
          %s2134 = scalar_lea.hbm %s7, %s2133
          %s2136 = sshll.u32 %s2118, 4
          %s2137 = int_to_ptr.vmem [resolvable:$true] %s2136
          %2139 = dma.vmem_to_hbm [thread:$0]  %s2137, 256, %s2134, %s2115
        $region52: #{tpu_custom_call.1} parent=47 // pred_fallthru
          _
        // Predicated region
        $region53: #{tpu_custom_call.1} parent=47 // pred_check
          %p2140 = pneg %p254
        $region54: #{tpu_custom_call.1} parent=47 // pred_check_branch
          %2142 = sbr.rel (%p2140) target = $region56
        $region55: #{tpu_custom_call.1} parent=47 // pred_region
          %s2143 = smul.u32 2, %s31
          %s2145 = ssub.s32 256, 256
          %2146 = vsyncadd %s2120, %s2145
          %s2147 = smul.addr %s30, 2
          %s2148 = sadd.s32 %s2143, %s2147
          %s2149 = smul.addr %s2148, 128
          %s2150 = scalar_lea.hbm %s8, %s2149
          %s2152 = sshll.u32 %s2123, 4
          %s2153 = int_to_ptr.vmem [resolvable:$true] %s2152
          %2155 = dma.vmem_to_hbm [thread:$0]  %s2153, 256, %s2150, %s2120
        $region56: #{tpu_custom_call.1} parent=47 // pred_fallthru
          _
      $region48: #{tpu_custom_call.1} parent=5 // pred_fallthru
        _
      %p2156 = scmp.le.s32.totalorder 2, %s21
      // Predicated region
      $region57: #{tpu_custom_call.1} parent=5 // pred_check
        %p2157 = pneg %p2156
      $region58: #{tpu_custom_call.1} parent=5 // pred_check_branch
        %2159 = sbr.rel (%p2157) target = $region60
      $region59: #{tpu_custom_call.1} parent=5 // pred_region
        %s2160 = ssub.s32 %s21, 2
        // Predicated region
        $region61: #{tpu_custom_call.1} parent=59 // pred_check
          %p2161 = pneg %p232
        $region62: #{tpu_custom_call.1} parent=59 // pred_check_branch
          %2163 = sbr.rel (%p2161) target = $region64
        $region63: #{tpu_custom_call.1} parent=59 // pred_region
          %s2164 = sand.u32 %s217, 1
          %s2165 = scalar_lea.sflag [#allocation3], %s2164
          %s2166 = sand.u32 %s217, 1
          %s2167 = smul.addr %s2166, 16
          %s2168 = scalar_lea.vmem [#allocation2], %s2167
          %2169 = dma.done %s2165, 256
        $region64: #{tpu_custom_call.1} parent=59 // pred_fallthru
          _
        // Predicated region
        $region65: #{tpu_custom_call.1} parent=59 // pred_check
          %p2170 = pneg %p260
        $region66: #{tpu_custom_call.1} parent=59 // pred_check_branch
          %2172 = sbr.rel (%p2170) target = $region68
        $region67: #{tpu_custom_call.1} parent=59 // pred_region
          %s2173 = sand.u32 %s245, 1
          %s2174 = scalar_lea.sflag [#allocation5], %s2173
          %s2175 = sand.u32 %s245, 1
          %s2176 = smul.addr %s2175, 16
          %s2177 = scalar_lea.vmem [#allocation4], %s2176
          %2178 = dma.done %s2174, 256
        $region68: #{tpu_custom_call.1} parent=59 // pred_fallthru
          _
      $region60: #{tpu_custom_call.1} parent=5 // pred_fallthru
        _
    $region6: #{tpu_custom_call.1} parent=1 // loop_footer
      %s25 = sadd.s32 1, %s21
    $region7: #{tpu_custom_call.1} parent=1 // loop_footer_branch
      %20 = sbr.rel target = $region3
    $region8: #{tpu_custom_call.1} parent=1 // loop_exit
      _
    %2179 = vsyncpa [#allocation3], 1
    %s2180 = scalar_lea.sflag [#allocation3], 1
    %2181 = vsyncpa %s2180, 1
    %2182 = vsyncpa [#allocation5], 1
    %s2183 = scalar_lea.sflag [#allocation5], 1
    %2184 = vsyncpa %s2183, 1

</llo_original>
